<compile_context>
chip_gen: v5e
topology: v5e:2x2
jax: 0.10.0
libtpu: 0.0.40
codegen_flags: <defaults>
</compile_context>

<pallas_src>
import math
import functools

import jax
import jax.numpy as jnp
from jax.experimental import pallas as pl
from jax.experimental.pallas import tpu as pltpu


LANE = 128   # lane-dense padding for every output-facing matmul dim
KPAD = 32    # conv im2col K (9*3=27) padded only to 32 (cheap DMA, same MXU cost)


# ----------------------------------------------------------------------------
# Config & synthetic deterministic parameters (hydra-configured encoder/inner
# model are replaced by a small conv encoder + 2-layer denoising MLP)
# ----------------------------------------------------------------------------
class BesoConfig:
    latent_dim = 32
    action_dim = 8
    action_seq_len = 8
    num_sampling_steps = 10
    sigma_data = 0.5
    sigma_min = 0.001
    sigma_max = 80.0
    conv_out_ch = 8
    hidden = 128
    obs_T = 2
    img_c = 3
    img_hw = 16


def init_params(cfg):
    key = jax.random.PRNGKey(42)
    ks = jax.random.split(key, 8)
    A = cfg.action_seq_len * cfg.action_dim
    Dc = cfg.obs_T * cfg.latent_dim + cfg.latent_dim
    scale = 0.05
    return {
        # img encoder: 3x3 SAME conv (C->conv_out_ch) as matmul, then linear to latent_dim
        "conv_w": scale * jax.random.normal(ks[0], (9 * cfg.img_c, cfg.conv_out_ch), jnp.float32),
        "conv_b": jnp.zeros((cfg.conv_out_ch,), jnp.float32),
        "enc_w": scale * jax.random.normal(ks[1], (cfg.conv_out_ch, cfg.latent_dim), jnp.float32),
        "enc_b": jnp.zeros((cfg.latent_dim,), jnp.float32),
        # inner denoising MLP
        "w1x": scale * jax.random.normal(ks[2], (A, cfg.hidden), jnp.float32),
        "w1c": scale * jax.random.normal(ks[3], (Dc, cfg.hidden), jnp.float32),
        "w1s": scale * jax.random.normal(ks[4], (1, cfg.hidden), jnp.float32),
        "b1": jnp.zeros((1, cfg.hidden), jnp.float32),
        "w2": scale * jax.random.normal(ks[5], (cfg.hidden, A), jnp.float32),
        "b2": jnp.zeros((1, A), jnp.float32),
    }


def _pad2(x, rows, cols):
    return jnp.pad(x, ((0, rows - x.shape[0]), (0, cols - x.shape[1])))


def _pad_row(x, cols):
    return jnp.pad(x, (0, cols - x.shape[0])).reshape(1, cols)


def prepare_params(params, cfg):
    """Zero-pad weights to lane-dense shapes and split w1c by its input slots
    (one block per obs frame + one for the language goal) so the conditioning
    projection can be computed in-kernel without assembling `cond`."""
    H = cfg.hidden
    L = cfg.latent_dim
    T = cfg.obs_T
    assert H % LANE == 0
    w1c = params["w1c"]                                        # (T*L + L, H)
    w1c_frames = jnp.stack(
        [_pad2(w1c[t * L:(t + 1) * L], LANE, H) for t in range(T)], axis=0)  # (T,128,H)
    w1c_lang = w1c[T * L:T * L + L]                            # (L, H)
    return {
        "conv_w": _pad2(params["conv_w"], KPAD, LANE).astype(jnp.bfloat16),
        "conv_b": _pad_row(params["conv_b"], LANE),
        "enc_w": _pad2(params["enc_w"], LANE, LANE),
        "enc_b": _pad_row(params["enc_b"], LANE),
        "w1x": _pad2(params["w1x"], LANE, H),
        "w1c_frames": w1c_frames,
        "w1c_lang": w1c_lang,
        "w1s": params["w1s"],
        "b1": params["b1"],
        "w2": _pad2(params["w2"], H, LANE),
        "b2": _pad2(params["b2"], 1, LANE),
    }


# ----------------------------------------------------------------------------
# Host-side sigma schedule (exponential) and per-step DDIM/Karras constants.
# Config-deterministic, so baked into the kernel as Python floats.
# ----------------------------------------------------------------------------
def ddim_step_constants(cfg):
    n = cfg.num_sampling_steps
    log_max, log_min = math.log(cfg.sigma_max), math.log(cfg.sigma_min)
    denom_n = max(n - 1, 1)
    sigmas = [math.exp(log_max + (log_min - log_max) * i / denom_n) for i in range(n)]
    sigmas.append(0.0)                                         # appended zero
    sd2 = cfg.sigma_data * cfg.sigma_data
    consts = []
    for i in range(n):
        s, s_next = sigmas[i], sigmas[i + 1]
        d = s * s + sd2
        c_skip = sd2 / d
        c_in = 1.0 / math.sqrt(d)
        c_out = s * cfg.sigma_data * c_in
        sig_emb = 0.25 * math.log(s)
        r = s_next / s                                         # 0.0 at the last step
        consts.append((c_skip, c_in, c_out, sig_emb, r))
    return tuple(consts)


# ----------------------------------------------------------------------------
# The single fused kernel: conv encoder + hoisted conditioning projection +
# fully unrolled DDIM sampling loop.  Runs once (no grid); everything resident
# in VMEM; one (B, 128) lane-dense store at the end.
# ----------------------------------------------------------------------------
def _beso_kernel(patches_ref, conv_w_ref, conv_b_ref, enc_w_ref, enc_b_ref,
                 lang_ref, x0_ref,
                 w1x_ref, w1c_frames_ref, w1c_lang_ref, w1s_ref, b1_ref,
                 w2_ref, b2_ref,
                 out_ref, *, obs_T, hw, inv_hw, step_consts):
    # ---------------- image encoder (runs exactly once) ----------------
    conv = jnp.dot(patches_ref[...], conv_w_ref[...],
                   preferred_element_type=jnp.float32)         # (T*B*HW, Cp) f32
    conv = jnp.maximum(conv + conv_b_ref[...], 0.0)
    n_frames = conv.shape[0] // hw
    pooled_rows = [
        jnp.sum(conv[f * hw:(f + 1) * hw], axis=0, keepdims=True) * inv_hw
        for f in range(n_frames)]
    pooled = jnp.concatenate(pooled_rows, axis=0)              # (T*B, Cp)
    emb = jnp.dot(pooled, enc_w_ref[...],
                  preferred_element_type=jnp.float32) + enc_b_ref[...]  # (T*B, Lp)

    # ---- conditioning projection (cond @ w1c + b1), hoisted out of the loop ----
    # emb rows are t-major: frame t of batch b lives at row t*B + b, and its
    # padded lanes (>= latent_dim) are exactly 0, so emb_t @ w1c_frames[t]
    # equals the corresponding row-block of the original cond @ w1c.
    B = x0_ref.shape[0]
    h_cond = jnp.dot(lang_ref[...], w1c_lang_ref[...],
                     preferred_element_type=jnp.float32) + b1_ref[...]
    for t in range(obs_T):
        h_cond = h_cond + jnp.dot(emb[t * B:(t + 1) * B], w1c_frames_ref[t],
                                  preferred_element_type=jnp.float32)

    # ---------------- DDIM sampling loop, fully unrolled ----------------
    w1x = w1x_ref[...]
    w1s = w1s_ref[...]
    w2 = w2_ref[...]
    b2 = b2_ref[...]
    x = x0_ref[...]                                            # (B, Ap)
    for c_skip, c_in, c_out, sig_emb, r in step_consts:
        # Karras-preconditioned denoiser: denoised = c_skip*x + c_out*F(c_in*x, cond, log(sig)/4)
        h = jnp.dot(x * c_in, w1x, preferred_element_type=jnp.float32)
        h = jnp.maximum(h + h_cond + sig_emb * w1s, 0.0)
        f = jnp.dot(h, w2, preferred_element_type=jnp.float32) + b2
        denoised = c_skip * x + c_out * f
        # sample_ddim update: x <- r*x + (1-r)*denoised ; r=0 at the last step.
        x = r * x + (1.0 - r) * denoised
    out_ref[...] = x


def beso_fused_call(pp, cfg, patches, lang_emb, x0):
    B = x0.shape[0]
    kernel = functools.partial(
        _beso_kernel,
        obs_T=cfg.obs_T,
        hw=cfg.img_hw * cfg.img_hw,
        inv_hw=1.0 / (cfg.img_hw * cfg.img_hw),
        step_consts=ddim_step_constants(cfg))
    vmem = pl.BlockSpec(memory_space=pltpu.MemorySpace.VMEM)   # whole array in VMEM
    return pl.pallas_call(
        kernel,
        out_shape=jax.ShapeDtypeStruct((B, LANE), jnp.float32),
        in_specs=[vmem] * 14,
        out_specs=vmem,
    )(patches, pp["conv_w"], pp["conv_b"], pp["enc_w"], pp["enc_b"],
      lang_emb, x0,
      pp["w1x"], pp["w1c_frames"], pp["w1c_lang"], pp["w1s"], pp["b1"],
      pp["w2"], pp["b2"])


# ----------------------------------------------------------------------------
# Glue: im2col for a 3x3 SAME conv (layout plumbing; all compute is in Pallas)
# TODO(synk): im2col could be moved in-kernel (9 shifted K=3 matmuls) to shave
# the remaining host-side slice/concat ops; with C=3 lanes it is layout-hostile,
# so it stays on the host here.
# ----------------------------------------------------------------------------
def im2col_3x3(x_nhwc):
    N, H, W, C = x_nhwc.shape
    xp = jnp.pad(x_nhwc, ((0, 0), (1, 1), (1, 1), (0, 0)))
    cols = [xp[:, dy:dy + H, dx:dx + W, :] for dy in range(3) for dx in range(3)]
    patches = jnp.concatenate(cols, axis=-1)                   # (N, H, W, 9C)
    return patches.reshape(N, H * W, 9 * C)


def make_patches(obs_img):
    """(B,T,C,H,W) -> t-major (T*B*H*W, KPAD) bf16 patches for the fused kernel."""
    B, T, C, H, W = obs_img.shape
    x = jnp.transpose(obs_img, (1, 0, 3, 4, 2)).reshape(T * B, H, W, C)  # t-major NHWC
    patches = im2col_3x3(x)                                    # (T*B, HW, 9C)
    patches = jnp.pad(patches, ((0, 0), (0, 0), (0, KPAD - 9 * C)))
    return patches.reshape(T * B * H * W, KPAD).astype(jnp.bfloat16)


# ----------------------------------------------------------------------------
# BESO forward (inference path of forward(): encode obs -> DDIM denoise actions)
# ----------------------------------------------------------------------------
def beso_forward(pp, cfg, obs_img, lang_emb, noise_key):
    B = obs_img.shape[0]
    A = cfg.action_seq_len * cfg.action_dim
    patches = make_patches(obs_img)
    # randn * sigma_max starting noise; padded lanes never leak into the first A
    # columns (w1x/w2/b2 padded rows/cols are zero), so no explicit zero-pad needed.
    x0 = jax.random.normal(noise_key, (B, LANE), jnp.float32) * cfg.sigma_max
    x = beso_fused_call(pp, cfg, patches, lang_emb, x0)
    return x[:, :A].reshape(B, cfg.action_seq_len, cfg.action_dim)


# TODO(synk): the training branch (diffusion_loss / rand_log_logistic sigma sampling)
# and the non-DDIM samplers (heun/dpm/lms/...) are not exercised by forward(if_train=False)
# and are omitted; optimizer / lr-scheduler config has no kernel equivalent.

if __name__ == "__main__":
    cfg = BesoConfig()
    params = init_params(cfg)
    pp = prepare_params(params, cfg)

    key = jax.random.PRNGKey(0)
    k_img, k_goal, k_noise = jax.random.split(key, 3)
    B = 2
    obs_img = jax.random.normal(
        k_img, (B, cfg.obs_T, cfg.img_c, cfg.img_hw, cfg.img_hw), jnp.float32)
    lang_emb = jax.random.normal(k_goal, (B, cfg.latent_dim), jnp.float32)

    fwd = jax.jit(functools.partial(beso_forward, pp, cfg))
    act_seq = fwd(obs_img, lang_emb, k_noise)
    jax.block_until_ready(act_seq)
    assert act_seq.shape == (B, cfg.action_seq_len, cfg.action_dim)
    assert bool(jnp.all(jnp.isfinite(act_seq)))
    print("KERNEL_OK")
</pallas_src>

<mosaic_0001>
module attributes {stable_mosaic.version = 11 : i64} {
  func.func @_beso_kernel(%arg0: memref<1024x32xbf16, #tpu.memory_space<vmem>>, %arg1: memref<32x128xbf16, #tpu.memory_space<vmem>>, %arg2: memref<1x128xf32, #tpu.memory_space<vmem>>, %arg3: memref<128x128xf32, #tpu.memory_space<vmem>>, %arg4: memref<1x128xf32, #tpu.memory_space<vmem>>, %arg5: memref<2x32xf32, #tpu.memory_space<vmem>>, %arg6: memref<2x128xf32, #tpu.memory_space<vmem>>, %arg7: memref<128x128xf32, #tpu.memory_space<vmem>>, %arg8: memref<2x128x128xf32, #tpu.memory_space<vmem>>, %arg9: memref<32x128xf32, #tpu.memory_space<vmem>>, %arg10: memref<1x128xf32, #tpu.memory_space<vmem>>, %arg11: memref<1x128xf32, #tpu.memory_space<vmem>>, %arg12: memref<128x128xf32, #tpu.memory_space<vmem>>, %arg13: memref<1x128xf32, #tpu.memory_space<vmem>>, %arg14: memref<2x128xf32, #tpu.memory_space<vmem>>) attributes {dimension_semantics = [], scalar_prefetch = 0 : i64, scratch_operands = 0 : i64, tpu.core_type = #tpu.core_type<tc>} {
    %c0 = arith.constant 0 : index
    %c0_0 = arith.constant 0 : index
    %0 = vector.load %arg0[%c0, %c0_0] : memref<1024x32xbf16, #tpu.memory_space<vmem>>, vector<1024x32xbf16>
    %c0_1 = arith.constant 0 : index
    %c0_2 = arith.constant 0 : index
    %1 = vector.load %arg1[%c0_1, %c0_2] : memref<32x128xbf16, #tpu.memory_space<vmem>>, vector<32x128xbf16>
    %cst = arith.constant dense<0.000000e+00> : vector<1024x128xf32>
    %2 = tpu.matmul %0, %1, %cst {dimension_numbers = #tpu.dot_dimension_numbers<[1], [0], [0], [1], [0, 0, 1, 1], [], []>} : vector<1024x32xbf16>, vector<32x128xbf16>, vector<1024x128xf32> -> vector<1024x128xf32>
    %c0_3 = arith.constant 0 : index
    %c0_4 = arith.constant 0 : index
    %3 = vector.load %arg2[%c0_3, %c0_4] : memref<1x128xf32, #tpu.memory_space<vmem>>, vector<1x128xf32>
    %4 = vector.broadcast %3 : vector<1x128xf32> to vector<1024x128xf32>
    %5 = arith.addf %2, %4 : vector<1024x128xf32>
    %cst_5 = arith.constant 0.000000e+00 : f32
    %6 = vector.broadcast %cst_5 : f32 to vector<1024x128xf32>
    %7 = arith.maximumf %5, %6 : vector<1024x128xf32>
    %8 = vector.extract_strided_slice %7 {offsets = [0, 0], sizes = [256, 128], strides = [1, 1]} : vector<1024x128xf32> to vector<256x128xf32>
    %cst_6 = arith.constant dense<0.000000e+00> : vector<128xf32>
    %9 = vector.multi_reduction <add>, %8, %cst_6 [0] : vector<256x128xf32> to vector<128xf32>
    %10 = vector.shape_cast %9 : vector<128xf32> to vector<1x128xf32>
    %cst_7 = arith.constant 3.906250e-03 : f32
    %11 = vector.broadcast %cst_7 : f32 to vector<1x128xf32>
    %12 = arith.mulf %10, %11 : vector<1x128xf32>
    %13 = vector.extract_strided_slice %7 {offsets = [256, 0], sizes = [256, 128], strides = [1, 1]} : vector<1024x128xf32> to vector<256x128xf32>
    %cst_8 = arith.constant dense<0.000000e+00> : vector<128xf32>
    %14 = vector.multi_reduction <add>, %13, %cst_8 [0] : vector<256x128xf32> to vector<128xf32>
    %15 = vector.shape_cast %14 : vector<128xf32> to vector<1x128xf32>
    %cst_9 = arith.constant 3.906250e-03 : f32
    %16 = vector.broadcast %cst_9 : f32 to vector<1x128xf32>
    %17 = arith.mulf %15, %16 : vector<1x128xf32>
    %18 = vector.extract_strided_slice %7 {offsets = [512, 0], sizes = [256, 128], strides = [1, 1]} : vector<1024x128xf32> to vector<256x128xf32>
    %cst_10 = arith.constant dense<0.000000e+00> : vector<128xf32>
    %19 = vector.multi_reduction <add>, %18, %cst_10 [0] : vector<256x128xf32> to vector<128xf32>
    %20 = vector.shape_cast %19 : vector<128xf32> to vector<1x128xf32>
    %cst_11 = arith.constant 3.906250e-03 : f32
    %21 = vector.broadcast %cst_11 : f32 to vector<1x128xf32>
    %22 = arith.mulf %20, %21 : vector<1x128xf32>
    %23 = vector.extract_strided_slice %7 {offsets = [768, 0], sizes = [256, 128], strides = [1, 1]} : vector<1024x128xf32> to vector<256x128xf32>
    %cst_12 = arith.constant dense<0.000000e+00> : vector<128xf32>
    %24 = vector.multi_reduction <add>, %23, %cst_12 [0] : vector<256x128xf32> to vector<128xf32>
    %25 = vector.shape_cast %24 : vector<128xf32> to vector<1x128xf32>
    %cst_13 = arith.constant 3.906250e-03 : f32
    %26 = vector.broadcast %cst_13 : f32 to vector<1x128xf32>
    %27 = arith.mulf %25, %26 : vector<1x128xf32>
    %28 = tpu.concatenate %12, %17, %22, %27 in 0 : vector<1x128xf32>, vector<1x128xf32>, vector<1x128xf32>, vector<1x128xf32> -> vector<4x128xf32>
    %c0_14 = arith.constant 0 : index
    %c0_15 = arith.constant 0 : index
    %29 = vector.load %arg3[%c0_14, %c0_15] : memref<128x128xf32, #tpu.memory_space<vmem>>, vector<128x128xf32>
    %cst_16 = arith.constant dense<0.000000e+00> : vector<4x128xf32>
    %30 = tpu.matmul %28, %29, %cst_16 {dimension_numbers = #tpu.dot_dimension_numbers<[1], [0], [0], [1], [0, 0, 1, 1], [], []>} : vector<4x128xf32>, vector<128x128xf32>, vector<4x128xf32> -> vector<4x128xf32>
    %c0_17 = arith.constant 0 : index
    %c0_18 = arith.constant 0 : index
    %31 = vector.load %arg4[%c0_17, %c0_18] : memref<1x128xf32, #tpu.memory_space<vmem>>, vector<1x128xf32>
    %32 = vector.broadcast %31 : vector<1x128xf32> to vector<4x128xf32>
    %33 = arith.addf %30, %32 : vector<4x128xf32>
    %c0_19 = arith.constant 0 : index
    %c0_20 = arith.constant 0 : index
    %34 = vector.load %arg5[%c0_19, %c0_20] : memref<2x32xf32, #tpu.memory_space<vmem>>, vector<2x32xf32>
    %c0_21 = arith.constant 0 : index
    %c0_22 = arith.constant 0 : index
    %35 = vector.load %arg9[%c0_21, %c0_22] : memref<32x128xf32, #tpu.memory_space<vmem>>, vector<32x128xf32>
    %cst_23 = arith.constant dense<0.000000e+00> : vector<2x128xf32>
    %36 = tpu.matmul %34, %35, %cst_23 {dimension_numbers = #tpu.dot_dimension_numbers<[1], [0], [0], [1], [0, 0, 1, 1], [], []>} : vector<2x32xf32>, vector<32x128xf32>, vector<2x128xf32> -> vector<2x128xf32>
    %c0_24 = arith.constant 0 : index
    %c0_25 = arith.constant 0 : index
    %37 = vector.load %arg11[%c0_24, %c0_25] : memref<1x128xf32, #tpu.memory_space<vmem>>, vector<1x128xf32>
    %38 = vector.broadcast %37 : vector<1x128xf32> to vector<2x128xf32>
    %39 = arith.addf %36, %38 : vector<2x128xf32>
    %40 = vector.extract_strided_slice %33 {offsets = [0, 0], sizes = [2, 128], strides = [1, 1]} : vector<4x128xf32> to vector<2x128xf32>
    %c0_26 = arith.constant 0 : index
    %c0_27 = arith.constant 0 : index
    %c0_28 = arith.constant 0 : index
    %41 = vector.load %arg8[%c0_26, %c0_27, %c0_28] : memref<2x128x128xf32, #tpu.memory_space<vmem>>, vector<1x128x128xf32>
    %42 = vector.shape_cast %41 : vector<1x128x128xf32> to vector<128x128xf32>
    %cst_29 = arith.constant dense<0.000000e+00> : vector<2x128xf32>
    %43 = tpu.matmul %40, %42, %cst_29 {dimension_numbers = #tpu.dot_dimension_numbers<[1], [0], [0], [1], [0, 0, 1, 1], [], []>} : vector<2x128xf32>, vector<128x128xf32>, vector<2x128xf32> -> vector<2x128xf32>
    %44 = arith.addf %39, %43 : vector<2x128xf32>
    %45 = vector.extract_strided_slice %33 {offsets = [2, 0], sizes = [2, 128], strides = [1, 1]} : vector<4x128xf32> to vector<2x128xf32>
    %c1 = arith.constant 1 : index
    %c0_30 = arith.constant 0 : index
    %c0_31 = arith.constant 0 : index
    %46 = vector.load %arg8[%c1, %c0_30, %c0_31] : memref<2x128x128xf32, #tpu.memory_space<vmem>>, vector<1x128x128xf32>
    %47 = vector.shape_cast %46 : vector<1x128x128xf32> to vector<128x128xf32>
    %cst_32 = arith.constant dense<0.000000e+00> : vector<2x128xf32>
    %48 = tpu.matmul %45, %47, %cst_32 {dimension_numbers = #tpu.dot_dimension_numbers<[1], [0], [0], [1], [0, 0, 1, 1], [], []>} : vector<2x128xf32>, vector<128x128xf32>, vector<2x128xf32> -> vector<2x128xf32>
    %49 = arith.addf %44, %48 : vector<2x128xf32>
    %c0_33 = arith.constant 0 : index
    %c0_34 = arith.constant 0 : index
    %50 = vector.load %arg7[%c0_33, %c0_34] : memref<128x128xf32, #tpu.memory_space<vmem>>, vector<128x128xf32>
    %c0_35 = arith.constant 0 : index
    %c0_36 = arith.constant 0 : index
    %51 = vector.load %arg10[%c0_35, %c0_36] : memref<1x128xf32, #tpu.memory_space<vmem>>, vector<1x128xf32>
    %c0_37 = arith.constant 0 : index
    %c0_38 = arith.constant 0 : index
    %52 = vector.load %arg12[%c0_37, %c0_38] : memref<128x128xf32, #tpu.memory_space<vmem>>, vector<128x128xf32>
    %c0_39 = arith.constant 0 : index
    %c0_40 = arith.constant 0 : index
    %53 = vector.load %arg13[%c0_39, %c0_40] : memref<1x128xf32, #tpu.memory_space<vmem>>, vector<1x128xf32>
    %c0_41 = arith.constant 0 : index
    %c0_42 = arith.constant 0 : index
    %54 = vector.load %arg6[%c0_41, %c0_42] : memref<2x128xf32, #tpu.memory_space<vmem>>, vector<2x128xf32>
    %cst_43 = arith.constant 0.0124997562 : f32
    %55 = vector.broadcast %cst_43 : f32 to vector<2x128xf32>
    %56 = arith.mulf %54, %55 : vector<2x128xf32>
    %cst_44 = arith.constant dense<0.000000e+00> : vector<2x128xf32>
    %57 = tpu.matmul %56, %50, %cst_44 {dimension_numbers = #tpu.dot_dimension_numbers<[1], [0], [0], [1], [0, 0, 1, 1], [], []>} : vector<2x128xf32>, vector<128x128xf32>, vector<2x128xf32> -> vector<2x128xf32>
    %58 = arith.addf %57, %49 : vector<2x128xf32>
    %cst_45 = arith.constant 1.09550667 : f32
    %59 = vector.broadcast %cst_45 : f32 to vector<1x128xf32>
    %60 = arith.mulf %59, %51 : vector<1x128xf32>
    %61 = vector.broadcast %60 : vector<1x128xf32> to vector<2x128xf32>
    %62 = arith.addf %58, %61 : vector<2x128xf32>
    %cst_46 = arith.constant 0.000000e+00 : f32
    %63 = vector.broadcast %cst_46 : f32 to vector<2x128xf32>
    %64 = arith.maximumf %62, %63 : vector<2x128xf32>
    %cst_47 = arith.constant dense<0.000000e+00> : vector<2x128xf32>
    %65 = tpu.matmul %64, %52, %cst_47 {dimension_numbers = #tpu.dot_dimension_numbers<[1], [0], [0], [1], [0, 0, 1, 1], [], []>} : vector<2x128xf32>, vector<128x128xf32>, vector<2x128xf32> -> vector<2x128xf32>
    %66 = vector.broadcast %53 : vector<1x128xf32> to vector<2x128xf32>
    %67 = arith.addf %65, %66 : vector<2x128xf32>
    %cst_48 = arith.constant 3.90609748E-5 : f32
    %68 = vector.broadcast %cst_48 : f32 to vector<2x128xf32>
    %69 = arith.mulf %68, %54 : vector<2x128xf32>
    %cst_49 = arith.constant 0.499990225 : f32
    %70 = vector.broadcast %cst_49 : f32 to vector<2x128xf32>
    %71 = arith.mulf %70, %67 : vector<2x128xf32>
    %72 = arith.addf %69, %71 : vector<2x128xf32>
    %cst_50 = arith.constant 0.285241187 : f32
    %73 = vector.broadcast %cst_50 : f32 to vector<2x128xf32>
    %74 = arith.mulf %73, %54 : vector<2x128xf32>
    %cst_51 = arith.constant 0.714758813 : f32
    %75 = vector.broadcast %cst_51 : f32 to vector<2x128xf32>
    %76 = arith.mulf %75, %72 : vector<2x128xf32>
    %77 = arith.addf %74, %76 : vector<2x128xf32>
    %cst_52 = arith.constant 0.0438120477 : f32
    %78 = vector.broadcast %cst_52 : f32 to vector<2x128xf32>
    %79 = arith.mulf %77, %78 : vector<2x128xf32>
    %cst_53 = arith.constant dense<0.000000e+00> : vector<2x128xf32>
    %80 = tpu.matmul %79, %50, %cst_53 {dimension_numbers = #tpu.dot_dimension_numbers<[1], [0], [0], [1], [0, 0, 1, 1], [], []>} : vector<2x128xf32>, vector<128x128xf32>, vector<2x128xf32> -> vector<2x128xf32>
    %81 = arith.addf %80, %49 : vector<2x128xf32>
    %cst_54 = arith.constant 0.781901598 : f32
    %82 = vector.broadcast %cst_54 : f32 to vector<1x128xf32>
    %83 = arith.mulf %82, %51 : vector<1x128xf32>
    %84 = vector.broadcast %83 : vector<1x128xf32> to vector<2x128xf32>
    %85 = arith.addf %81, %84 : vector<2x128xf32>
    %cst_55 = arith.constant 0.000000e+00 : f32
    %86 = vector.broadcast %cst_55 : f32 to vector<2x128xf32>
    %87 = arith.maximumf %85, %86 : vector<2x128xf32>
    %cst_56 = arith.constant dense<0.000000e+00> : vector<2x128xf32>
    %88 = tpu.matmul %87, %52, %cst_56 {dimension_numbers = #tpu.dot_dimension_numbers<[1], [0], [0], [1], [0, 0, 1, 1], [], []>} : vector<2x128xf32>, vector<128x128xf32>, vector<2x128xf32> -> vector<2x128xf32>
    %89 = vector.broadcast %53 : vector<1x128xf32> to vector<2x128xf32>
    %90 = arith.addf %88, %89 : vector<2x128xf32>
    %cst_57 = arith.constant 4.7987391E-4 : f32
    %91 = vector.broadcast %cst_57 : f32 to vector<2x128xf32>
    %92 = arith.mulf %91, %77 : vector<2x128xf32>
    %cst_58 = arith.constant 0.499880016 : f32
    %93 = vector.broadcast %cst_58 : f32 to vector<2x128xf32>
    %94 = arith.mulf %93, %90 : vector<2x128xf32>
    %95 = arith.addf %92, %94 : vector<2x128xf32>
    %cst_59 = arith.constant 0.285241187 : f32
    %96 = vector.broadcast %cst_59 : f32 to vector<2x128xf32>
    %97 = arith.mulf %96, %77 : vector<2x128xf32>
    %cst_60 = arith.constant 0.714758813 : f32
    %98 = vector.broadcast %cst_60 : f32 to vector<2x128xf32>
    %99 = arith.mulf %98, %95 : vector<2x128xf32>
    %100 = arith.addf %97, %99 : vector<2x128xf32>
    %cst_61 = arith.constant 0.153182089 : f32
    %101 = vector.broadcast %cst_61 : f32 to vector<2x128xf32>
    %102 = arith.mulf %100, %101 : vector<2x128xf32>
    %cst_62 = arith.constant dense<0.000000e+00> : vector<2x128xf32>
    %103 = tpu.matmul %102, %50, %cst_62 {dimension_numbers = #tpu.dot_dimension_numbers<[1], [0], [0], [1], [0, 0, 1, 1], [], []>} : vector<2x128xf32>, vector<128x128xf32>, vector<2x128xf32> -> vector<2x128xf32>
    %104 = arith.addf %103, %49 : vector<2x128xf32>
    %cst_63 = arith.constant 0.468296558 : f32
    %105 = vector.broadcast %cst_63 : f32 to vector<1x128xf32>
    %106 = arith.mulf %105, %51 : vector<1x128xf32>
    %107 = vector.broadcast %106 : vector<1x128xf32> to vector<2x128xf32>
    %108 = arith.addf %104, %107 : vector<2x128xf32>
    %cst_64 = arith.constant 0.000000e+00 : f32
    %109 = vector.broadcast %cst_64 : f32 to vector<2x128xf32>
    %110 = arith.maximumf %108, %109 : vector<2x128xf32>
    %cst_65 = arith.constant dense<0.000000e+00> : vector<2x128xf32>
    %111 = tpu.matmul %110, %52, %cst_65 {dimension_numbers = #tpu.dot_dimension_numbers<[1], [0], [0], [1], [0, 0, 1, 1], [], []>} : vector<2x128xf32>, vector<128x128xf32>, vector<2x128xf32> -> vector<2x128xf32>
    %112 = vector.broadcast %53 : vector<1x128xf32> to vector<2x128xf32>
    %113 = arith.addf %111, %112 : vector<2x128xf32>
    %cst_66 = arith.constant 0.00586618809 : f32
    %114 = vector.broadcast %cst_66 : f32 to vector<2x128xf32>
    %115 = arith.mulf %114, %100 : vector<2x128xf32>
    %cst_67 = arith.constant 0.498531282 : f32
    %116 = vector.broadcast %cst_67 : f32 to vector<2x128xf32>
    %117 = arith.mulf %116, %113 : vector<2x128xf32>
    %118 = arith.addf %115, %117 : vector<2x128xf32>
    %cst_68 = arith.constant 0.285241187 : f32
    %119 = vector.broadcast %cst_68 : f32 to vector<2x128xf32>
    %120 = arith.mulf %119, %100 : vector<2x128xf32>
    %cst_69 = arith.constant 0.714758813 : f32
    %121 = vector.broadcast %cst_69 : f32 to vector<2x128xf32>
    %122 = arith.mulf %121, %118 : vector<2x128xf32>
    %123 = arith.addf %120, %122 : vector<2x128xf32>
    %cst_70 = arith.constant 0.520079434 : f32
    %124 = vector.broadcast %cst_70 : f32 to vector<2x128xf32>
    %125 = arith.mulf %123, %124 : vector<2x128xf32>
    %cst_71 = arith.constant dense<0.000000e+00> : vector<2x128xf32>
    %126 = tpu.matmul %125, %50, %cst_71 {dimension_numbers = #tpu.dot_dimension_numbers<[1], [0], [0], [1], [0, 0, 1, 1], [], []>} : vector<2x128xf32>, vector<128x128xf32>, vector<2x128xf32> -> vector<2x128xf32>
    %127 = arith.addf %126, %49 : vector<2x128xf32>
    %cst_72 = arith.constant 0.154691502 : f32
    %128 = vector.broadcast %cst_72 : f32 to vector<1x128xf32>
    %129 = arith.mulf %128, %51 : vector<1x128xf32>
    %130 = vector.broadcast %129 : vector<1x128xf32> to vector<2x128xf32>
    %131 = arith.addf %127, %130 : vector<2x128xf32>
    %cst_73 = arith.constant 0.000000e+00 : f32
    %132 = vector.broadcast %cst_73 : f32 to vector<2x128xf32>
    %133 = arith.maximumf %131, %132 : vector<2x128xf32>
    %cst_74 = arith.constant dense<0.000000e+00> : vector<2x128xf32>
    %134 = tpu.matmul %133, %52, %cst_74 {dimension_numbers = #tpu.dot_dimension_numbers<[1], [0], [0], [1], [0, 0, 1, 1], [], []>} : vector<2x128xf32>, vector<128x128xf32>, vector<2x128xf32> -> vector<2x128xf32>
    %135 = vector.broadcast %53 : vector<1x128xf32> to vector<2x128xf32>
    %136 = arith.addf %134, %135 : vector<2x128xf32>
    %cst_75 = arith.constant 0.0676206499 : f32
    %137 = vector.broadcast %cst_75 : f32 to vector<2x128xf32>
    %138 = arith.mulf %137, %123 : vector<2x128xf32>
    %cst_76 = arith.constant 0.482798964 : f32
    %139 = vector.broadcast %cst_76 : f32 to vector<2x128xf32>
    %140 = arith.mulf %139, %136 : vector<2x128xf32>
    %141 = arith.addf %138, %140 : vector<2x128xf32>
    %cst_77 = arith.constant 0.285241187 : f32
    %142 = vector.broadcast %cst_77 : f32 to vector<2x128xf32>
    %143 = arith.mulf %142, %123 : vector<2x128xf32>
    %cst_78 = arith.constant 0.714758813 : f32
    %144 = vector.broadcast %cst_78 : f32 to vector<2x128xf32>
    %145 = arith.mulf %144, %141 : vector<2x128xf32>
    %146 = arith.addf %143, %145 : vector<2x128xf32>
    %cst_79 = arith.constant 1.3730042 : f32
    %147 = vector.broadcast %cst_79 : f32 to vector<2x128xf32>
    %148 = arith.mulf %146, %147 : vector<2x128xf32>
    %cst_80 = arith.constant dense<0.000000e+00> : vector<2x128xf32>
    %149 = tpu.matmul %148, %50, %cst_80 {dimension_numbers = #tpu.dot_dimension_numbers<[1], [0], [0], [1], [0, 0, 1, 1], [], []>} : vector<2x128xf32>, vector<128x128xf32>, vector<2x128xf32> -> vector<2x128xf32>
    %150 = arith.addf %149, %49 : vector<2x128xf32>
    %cst_81 = arith.constant -0.158913553 : f32
    %151 = vector.broadcast %cst_81 : f32 to vector<1x128xf32>
    %152 = arith.mulf %151, %51 : vector<1x128xf32>
    %153 = vector.broadcast %152 : vector<1x128xf32> to vector<2x128xf32>
    %154 = arith.addf %150, %153 : vector<2x128xf32>
    %cst_82 = arith.constant 0.000000e+00 : f32
    %155 = vector.broadcast %cst_82 : f32 to vector<2x128xf32>
    %156 = arith.maximumf %154, %155 : vector<2x128xf32>
    %cst_83 = arith.constant dense<0.000000e+00> : vector<2x128xf32>
    %157 = tpu.matmul %156, %52, %cst_83 {dimension_numbers = #tpu.dot_dimension_numbers<[1], [0], [0], [1], [0, 0, 1, 1], [], []>} : vector<2x128xf32>, vector<128x128xf32>, vector<2x128xf32> -> vector<2x128xf32>
    %158 = vector.broadcast %53 : vector<1x128xf32> to vector<2x128xf32>
    %159 = arith.addf %157, %158 : vector<2x128xf32>
    %cst_84 = arith.constant 0.471285135 : f32
    %160 = vector.broadcast %cst_84 : f32 to vector<2x128xf32>
    %161 = arith.mulf %160, %146 : vector<2x128xf32>
    %cst_85 = arith.constant 0.363563895 : f32
    %162 = vector.broadcast %cst_85 : f32 to vector<2x128xf32>
    %163 = arith.mulf %162, %159 : vector<2x128xf32>
    %164 = arith.addf %161, %163 : vector<2x128xf32>
    %cst_86 = arith.constant 0.285241187 : f32
    %165 = vector.broadcast %cst_86 : f32 to vector<2x128xf32>
    %166 = arith.mulf %165, %146 : vector<2x128xf32>
    %cst_87 = arith.constant 0.714758813 : f32
    %167 = vector.broadcast %cst_87 : f32 to vector<2x128xf32>
    %168 = arith.mulf %167, %164 : vector<2x128xf32>
    %169 = arith.addf %166, %168 : vector<2x128xf32>
    %cst_88 = arith.constant 1.91453123 : f32
    %170 = vector.broadcast %cst_88 : f32 to vector<2x128xf32>
    %171 = arith.mulf %169, %170 : vector<2x128xf32>
    %cst_89 = arith.constant dense<0.000000e+00> : vector<2x128xf32>
    %172 = tpu.matmul %171, %50, %cst_89 {dimension_numbers = #tpu.dot_dimension_numbers<[1], [0], [0], [1], [0, 0, 1, 1], [], []>} : vector<2x128xf32>, vector<128x128xf32>, vector<2x128xf32> -> vector<2x128xf32>
    %173 = arith.addf %172, %49 : vector<2x128xf32>
    %cst_90 = arith.constant -0.472518593 : f32
    %174 = vector.broadcast %cst_90 : f32 to vector<1x128xf32>
    %175 = arith.mulf %174, %51 : vector<1x128xf32>
    %176 = vector.broadcast %175 : vector<1x128xf32> to vector<2x128xf32>
    %177 = arith.addf %173, %176 : vector<2x128xf32>
    %cst_91 = arith.constant 0.000000e+00 : f32
    %178 = vector.broadcast %cst_91 : f32 to vector<2x128xf32>
    %179 = arith.maximumf %177, %178 : vector<2x128xf32>
    %cst_92 = arith.constant dense<0.000000e+00> : vector<2x128xf32>
    %180 = tpu.matmul %179, %52, %cst_92 {dimension_numbers = #tpu.dot_dimension_numbers<[1], [0], [0], [1], [0, 0, 1, 1], [], []>} : vector<2x128xf32>, vector<128x128xf32>, vector<2x128xf32> -> vector<2x128xf32>
    %181 = vector.broadcast %53 : vector<1x128xf32> to vector<2x128xf32>
    %182 = arith.addf %180, %181 : vector<2x128xf32>
    %cst_93 = arith.constant 0.916357457 : f32
    %183 = vector.broadcast %cst_93 : f32 to vector<2x128xf32>
    %184 = arith.mulf %183, %169 : vector<2x128xf32>
    %cst_94 = arith.constant 0.144605085 : f32
    %185 = vector.broadcast %cst_94 : f32 to vector<2x128xf32>
    %186 = arith.mulf %185, %182 : vector<2x128xf32>
    %187 = arith.addf %184, %186 : vector<2x128xf32>
    %cst_95 = arith.constant 0.285241187 : f32
    %188 = vector.broadcast %cst_95 : f32 to vector<2x128xf32>
    %189 = arith.mulf %188, %169 : vector<2x128xf32>
    %cst_96 = arith.constant 0.714758813 : f32
    %190 = vector.broadcast %cst_96 : f32 to vector<2x128xf32>
    %191 = arith.mulf %190, %187 : vector<2x128xf32>
    %192 = arith.addf %189, %191 : vector<2x128xf32>
    %cst_97 = arith.constant 1.99261463 : f32
    %193 = vector.broadcast %cst_97 : f32 to vector<2x128xf32>
    %194 = arith.mulf %192, %193 : vector<2x128xf32>
    %cst_98 = arith.constant dense<0.000000e+00> : vector<2x128xf32>
    %195 = tpu.matmul %194, %50, %cst_98 {dimension_numbers = #tpu.dot_dimension_numbers<[1], [0], [0], [1], [0, 0, 1, 1], [], []>} : vector<2x128xf32>, vector<128x128xf32>, vector<2x128xf32> -> vector<2x128xf32>
    %196 = arith.addf %195, %49 : vector<2x128xf32>
    %cst_99 = arith.constant -0.786123633 : f32
    %197 = vector.broadcast %cst_99 : f32 to vector<1x128xf32>
    %198 = arith.mulf %197, %51 : vector<1x128xf32>
    %199 = vector.broadcast %198 : vector<1x128xf32> to vector<2x128xf32>
    %200 = arith.addf %196, %199 : vector<2x128xf32>
    %cst_100 = arith.constant 0.000000e+00 : f32
    %201 = vector.broadcast %cst_100 : f32 to vector<2x128xf32>
    %202 = arith.maximumf %200, %201 : vector<2x128xf32>
    %cst_101 = arith.constant dense<0.000000e+00> : vector<2x128xf32>
    %203 = tpu.matmul %202, %52, %cst_101 {dimension_numbers = #tpu.dot_dimension_numbers<[1], [0], [0], [1], [0, 0, 1, 1], [], []>} : vector<2x128xf32>, vector<128x128xf32>, vector<2x128xf32> -> vector<2x128xf32>
    %204 = vector.broadcast %53 : vector<1x128xf32> to vector<2x128xf32>
    %205 = arith.addf %203, %204 : vector<2x128xf32>
    %cst_102 = arith.constant 0.992628216 : f32
    %206 = vector.broadcast %cst_102 : f32 to vector<2x128xf32>
    %207 = arith.mulf %206, %192 : vector<2x128xf32>
    %cst_103 = arith.constant 0.0429295786 : f32
    %208 = vector.broadcast %cst_103 : f32 to vector<2x128xf32>
    %209 = arith.mulf %208, %205 : vector<2x128xf32>
    %210 = arith.addf %207, %209 : vector<2x128xf32>
    %cst_104 = arith.constant 0.285241187 : f32
    %211 = vector.broadcast %cst_104 : f32 to vector<2x128xf32>
    %212 = arith.mulf %211, %192 : vector<2x128xf32>
    %cst_105 = arith.constant 0.714758813 : f32
    %213 = vector.broadcast %cst_105 : f32 to vector<2x128xf32>
    %214 = arith.mulf %213, %210 : vector<2x128xf32>
    %215 = arith.addf %212, %214 : vector<2x128xf32>
    %cst_106 = arith.constant 1.99939609 : f32
    %216 = vector.broadcast %cst_106 : f32 to vector<2x128xf32>
    %217 = arith.mulf %215, %216 : vector<2x128xf32>
    %cst_107 = arith.constant dense<0.000000e+00> : vector<2x128xf32>
    %218 = tpu.matmul %217, %50, %cst_107 {dimension_numbers = #tpu.dot_dimension_numbers<[1], [0], [0], [1], [0, 0, 1, 1], [], []>} : vector<2x128xf32>, vector<128x128xf32>, vector<2x128xf32> -> vector<2x128xf32>
    %219 = arith.addf %218, %49 : vector<2x128xf32>
    %cst_108 = arith.constant -1.0997287 : f32
    %220 = vector.broadcast %cst_108 : f32 to vector<1x128xf32>
    %221 = arith.mulf %220, %51 : vector<1x128xf32>
    %222 = vector.broadcast %221 : vector<1x128xf32> to vector<2x128xf32>
    %223 = arith.addf %219, %222 : vector<2x128xf32>
    %cst_109 = arith.constant 0.000000e+00 : f32
    %224 = vector.broadcast %cst_109 : f32 to vector<2x128xf32>
    %225 = arith.maximumf %223, %224 : vector<2x128xf32>
    %cst_110 = arith.constant dense<0.000000e+00> : vector<2x128xf32>
    %226 = tpu.matmul %225, %52, %cst_110 {dimension_numbers = #tpu.dot_dimension_numbers<[1], [0], [0], [1], [0, 0, 1, 1], [], []>} : vector<2x128xf32>, vector<128x128xf32>, vector<2x128xf32> -> vector<2x128xf32>
    %227 = vector.broadcast %53 : vector<1x128xf32> to vector<2x128xf32>
    %228 = arith.addf %226, %227 : vector<2x128xf32>
    %cst_111 = arith.constant 0.999396145 : f32
    %229 = vector.broadcast %cst_111 : f32 to vector<2x128xf32>
    %230 = arith.mulf %229, %215 : vector<2x128xf32>
    %cst_112 = arith.constant 0.0122869583 : f32
    %231 = vector.broadcast %cst_112 : f32 to vector<2x128xf32>
    %232 = arith.mulf %231, %228 : vector<2x128xf32>
    %233 = arith.addf %230, %232 : vector<2x128xf32>
    %cst_113 = arith.constant 0.285241187 : f32
    %234 = vector.broadcast %cst_113 : f32 to vector<2x128xf32>
    %235 = arith.mulf %234, %215 : vector<2x128xf32>
    %cst_114 = arith.constant 0.714758813 : f32
    %236 = vector.broadcast %cst_114 : f32 to vector<2x128xf32>
    %237 = arith.mulf %236, %233 : vector<2x128xf32>
    %238 = arith.addf %235, %237 : vector<2x128xf32>
    %cst_115 = arith.constant 1.99995089 : f32
    %239 = vector.broadcast %cst_115 : f32 to vector<2x128xf32>
    %240 = arith.mulf %238, %239 : vector<2x128xf32>
    %cst_116 = arith.constant dense<0.000000e+00> : vector<2x128xf32>
    %241 = tpu.matmul %240, %50, %cst_116 {dimension_numbers = #tpu.dot_dimension_numbers<[1], [0], [0], [1], [0, 0, 1, 1], [], []>} : vector<2x128xf32>, vector<128x128xf32>, vector<2x128xf32> -> vector<2x128xf32>
    %242 = arith.addf %241, %49 : vector<2x128xf32>
    %cst_117 = arith.constant -1.41333377 : f32
    %243 = vector.broadcast %cst_117 : f32 to vector<1x128xf32>
    %244 = arith.mulf %243, %51 : vector<1x128xf32>
    %245 = vector.broadcast %244 : vector<1x128xf32> to vector<2x128xf32>
    %246 = arith.addf %242, %245 : vector<2x128xf32>
    %cst_118 = arith.constant 0.000000e+00 : f32
    %247 = vector.broadcast %cst_118 : f32 to vector<2x128xf32>
    %248 = arith.maximumf %246, %247 : vector<2x128xf32>
    %cst_119 = arith.constant dense<0.000000e+00> : vector<2x128xf32>
    %249 = tpu.matmul %248, %52, %cst_119 {dimension_numbers = #tpu.dot_dimension_numbers<[1], [0], [0], [1], [0, 0, 1, 1], [], []>} : vector<2x128xf32>, vector<128x128xf32>, vector<2x128xf32> -> vector<2x128xf32>
    %250 = vector.broadcast %53 : vector<1x128xf32> to vector<2x128xf32>
    %251 = arith.addf %249, %250 : vector<2x128xf32>
    %cst_120 = arith.constant 0.999950826 : f32
    %252 = vector.broadcast %cst_120 : f32 to vector<2x128xf32>
    %253 = arith.mulf %252, %238 : vector<2x128xf32>
    %cst_121 = arith.constant 0.00350571889 : f32
    %254 = vector.broadcast %cst_121 : f32 to vector<2x128xf32>
    %255 = arith.mulf %254, %251 : vector<2x128xf32>
    %256 = arith.addf %253, %255 : vector<2x128xf32>
    %cst_122 = arith.constant 0.285241187 : f32
    %257 = vector.broadcast %cst_122 : f32 to vector<2x128xf32>
    %258 = arith.mulf %257, %238 : vector<2x128xf32>
    %cst_123 = arith.constant 0.714758813 : f32
    %259 = vector.broadcast %cst_123 : f32 to vector<2x128xf32>
    %260 = arith.mulf %259, %256 : vector<2x128xf32>
    %261 = arith.addf %258, %260 : vector<2x128xf32>
    %cst_124 = arith.constant 1.99999595 : f32
    %262 = vector.broadcast %cst_124 : f32 to vector<2x128xf32>
    %263 = arith.mulf %261, %262 : vector<2x128xf32>
    %cst_125 = arith.constant dense<0.000000e+00> : vector<2x128xf32>
    %264 = tpu.matmul %263, %50, %cst_125 {dimension_numbers = #tpu.dot_dimension_numbers<[1], [0], [0], [1], [0, 0, 1, 1], [], []>} : vector<2x128xf32>, vector<128x128xf32>, vector<2x128xf32> -> vector<2x128xf32>
    %265 = arith.addf %264, %49 : vector<2x128xf32>
    %cst_126 = arith.constant -1.72693884 : f32
    %266 = vector.broadcast %cst_126 : f32 to vector<1x128xf32>
    %267 = arith.mulf %266, %51 : vector<1x128xf32>
    %268 = vector.broadcast %267 : vector<1x128xf32> to vector<2x128xf32>
    %269 = arith.addf %265, %268 : vector<2x128xf32>
    %cst_127 = arith.constant 0.000000e+00 : f32
    %270 = vector.broadcast %cst_127 : f32 to vector<2x128xf32>
    %271 = arith.maximumf %269, %270 : vector<2x128xf32>
    %cst_128 = arith.constant dense<0.000000e+00> : vector<2x128xf32>
    %272 = tpu.matmul %271, %52, %cst_128 {dimension_numbers = #tpu.dot_dimension_numbers<[1], [0], [0], [1], [0, 0, 1, 1], [], []>} : vector<2x128xf32>, vector<128x128xf32>, vector<2x128xf32> -> vector<2x128xf32>
    %273 = vector.broadcast %53 : vector<1x128xf32> to vector<2x128xf32>
    %274 = arith.addf %272, %273 : vector<2x128xf32>
    %cst_129 = arith.constant 9.999960e-01 : f32
    %275 = vector.broadcast %cst_129 : f32 to vector<2x128xf32>
    %276 = arith.mulf %275, %261 : vector<2x128xf32>
    %cst_130 = arith.constant 9.99997952E-4 : f32
    %277 = vector.broadcast %cst_130 : f32 to vector<2x128xf32>
    %278 = arith.mulf %277, %274 : vector<2x128xf32>
    %279 = arith.addf %276, %278 : vector<2x128xf32>
    %cst_131 = arith.constant 0.000000e+00 : f32
    %280 = vector.broadcast %cst_131 : f32 to vector<2x128xf32>
    %281 = arith.mulf %280, %261 : vector<2x128xf32>
    %cst_132 = arith.constant 1.000000e+00 : f32
    %282 = vector.broadcast %cst_132 : f32 to vector<2x128xf32>
    %283 = arith.mulf %282, %279 : vector<2x128xf32>
    %284 = arith.addf %281, %283 : vector<2x128xf32>
    %c0_133 = arith.constant 0 : index
    %c0_134 = arith.constant 0 : index
    %285 = vector.load %arg14[%c0_133, %c0_134] : memref<2x128xf32, #tpu.memory_space<vmem>>, vector<2x128xf32>
    tpu.vector_store %arg14[%c0_133, %c0_134], %284 {strides = array<i32>} : memref<2x128xf32, #tpu.memory_space<vmem>>, vector<2x128xf32>,
    return
  }
}

</mosaic_0001>

<llo_original>
// kernel: beso_forward.1
$region0: #{beso_forward.1}
  #allocation0 [shape = 'u32[]', space=smem, size = 0x4, offset = 0x4, fixed_abs, tag = 'smem constant byte address 0x4 - core index']
  #allocation1 [shape = 'u32[72,128]{1,0:T(1,128)}', space=vmem, size = 0x9000, scoped, tag = 'internal scratch']
  %s0 = inlined_call_operand.vmem [shape: bf16[1024,32], index: 0, kind: input, shape index: {}]
  %s1 = inlined_call_operand.vmem [shape: bf16[32,128], index: 1, kind: input, shape index: {}]
  %s2 = inlined_call_operand.vmem [shape: f32[1,128], index: 2, kind: input, shape index: {}, may-alias: {2,4,11,13}]
  %s3 = inlined_call_operand.vmem [shape: f32[128,128], index: 3, kind: input, shape index: {}]
  %s4 = inlined_call_operand.vmem [shape: f32[1,128], index: 4, kind: input, shape index: {}, may-alias: {2,4,11,13}]
  %s5 = inlined_call_operand.vmem [shape: f32[2,32], index: 5, kind: input, shape index: {}]
  %s6 = inlined_call_operand.vmem [shape: f32[2,128], index: 6, kind: input, shape index: {}]
  %s7 = inlined_call_operand.vmem [shape: f32[128,128], index: 7, kind: input, shape index: {}]
  %s8 = inlined_call_operand.vmem [shape: f32[2,128,128], index: 8, kind: input, shape index: {}]
  %s9 = inlined_call_operand.vmem [shape: f32[32,128], index: 9, kind: input, shape index: {}]
  %s10 = inlined_call_operand.vmem [shape: f32[1,128], index: 10, kind: input, shape index: {}]
  %s11 = inlined_call_operand.vmem [shape: f32[1,128], index: 11, kind: input, shape index: {}, may-alias: {2,4,11,13}]
  %s12 = inlined_call_operand.vmem [shape: f32[128,128], index: 12, kind: input, shape index: {}]
  %s13 = inlined_call_operand.vmem [shape: f32[1,128], index: 13, kind: input, shape index: {}, may-alias: {2,4,11,13}]
  %s14 = inlined_call_operand.vmem [shape: f32[2,128], index: 14, kind: output, shape index: {}]
  %s15 = sld [smem:[#allocation0]]
  $region66: #{beso_forward.1} parent=0
    _
  %s17 = ssub.s32 1, %s15
  %s18 = scalar_select 0, %s17, %s15
  // Predicated region
  $region2: #{beso_forward.1} parent=0 // pred_check
    _
  $region3: #{beso_forward.1} parent=0 // pred_check_branch
    %20 = sbr.rel (0) target = $region5
  $region4: #{beso_forward.1} parent=0 // pred_region
    _
  $region5: #{beso_forward.1} parent=0 // pred_fallthru
    _
  // Predicated region
  $region6: #{beso_forward.1} parent=0 // pred_check
    _
  $region7: #{beso_forward.1} parent=0 // pred_check_branch
    %22 = sbr.rel (0) target = $region9
  $region8: #{beso_forward.1} parent=0 // pred_region
    _
  $region9: #{beso_forward.1} parent=0 // pred_fallthru
    _
  // Predicated region
  $region10: #{beso_forward.1} parent=0 // pred_check
    _
  $region11: #{beso_forward.1} parent=0 // pred_check_branch
    %24 = sbr.rel (0) target = $region13
  $region12: #{beso_forward.1} parent=0 // pred_region
    _
  $region13: #{beso_forward.1} parent=0 // pred_fallthru
    _
  // Predicated region
  $region14: #{beso_forward.1} parent=0 // pred_check
    _
  $region15: #{beso_forward.1} parent=0 // pred_check_branch
    %26 = sbr.rel (0) target = $region17
  $region16: #{beso_forward.1} parent=0 // pred_region
    _
  $region17: #{beso_forward.1} parent=0 // pred_fallthru
    _
  // Predicated region
  $region18: #{beso_forward.1} parent=0 // pred_check
    _
  $region19: #{beso_forward.1} parent=0 // pred_check_branch
    %28 = sbr.rel (0) target = $region21
  $region20: #{beso_forward.1} parent=0 // pred_region
    _
  $region21: #{beso_forward.1} parent=0 // pred_fallthru
    _
  // Predicated region
  $region22: #{beso_forward.1} parent=0 // pred_check
    _
  $region23: #{beso_forward.1} parent=0 // pred_check_branch
    %30 = sbr.rel (0) target = $region25
  $region24: #{beso_forward.1} parent=0 // pred_region
    _
  $region25: #{beso_forward.1} parent=0 // pred_fallthru
    _
  // Predicated region
  $region26: #{beso_forward.1} parent=0 // pred_check
    _
  $region27: #{beso_forward.1} parent=0 // pred_check_branch
    %32 = sbr.rel (0) target = $region29
  $region28: #{beso_forward.1} parent=0 // pred_region
    _
  $region29: #{beso_forward.1} parent=0 // pred_fallthru
    _
  // Predicated region
  $region30: #{beso_forward.1} parent=0 // pred_check
    _
  $region31: #{beso_forward.1} parent=0 // pred_check_branch
    %34 = sbr.rel (0) target = $region33
  $region32: #{beso_forward.1} parent=0 // pred_region
    _
  $region33: #{beso_forward.1} parent=0 // pred_fallthru
    _
  // Predicated region
  $region34: #{beso_forward.1} parent=0 // pred_check
    _
  $region35: #{beso_forward.1} parent=0 // pred_check_branch
    %36 = sbr.rel (0) target = $region37
  $region36: #{beso_forward.1} parent=0 // pred_region
    _
  $region37: #{beso_forward.1} parent=0 // pred_fallthru
    _
  // Predicated region
  $region38: #{beso_forward.1} parent=0 // pred_check
    _
  $region39: #{beso_forward.1} parent=0 // pred_check_branch
    %38 = sbr.rel (0) target = $region41
  $region40: #{beso_forward.1} parent=0 // pred_region
    _
  $region41: #{beso_forward.1} parent=0 // pred_fallthru
    _
  // Predicated region
  $region42: #{beso_forward.1} parent=0 // pred_check
    _
  $region43: #{beso_forward.1} parent=0 // pred_check_branch
    %40 = sbr.rel (0) target = $region45
  $region44: #{beso_forward.1} parent=0 // pred_region
    _
  $region45: #{beso_forward.1} parent=0 // pred_fallthru
    _
  // Predicated region
  $region46: #{beso_forward.1} parent=0 // pred_check
    _
  $region47: #{beso_forward.1} parent=0 // pred_check_branch
    %42 = sbr.rel (0) target = $region49
  $region48: #{beso_forward.1} parent=0 // pred_region
    _
  $region49: #{beso_forward.1} parent=0 // pred_fallthru
    _
  // Predicated region
  $region50: #{beso_forward.1} parent=0 // pred_check
    _
  $region51: #{beso_forward.1} parent=0 // pred_check_branch
    %44 = sbr.rel (0) target = $region53
  $region52: #{beso_forward.1} parent=0 // pred_region
    _
  $region53: #{beso_forward.1} parent=0 // pred_fallthru
    _
  // Predicated region
  $region54: #{beso_forward.1} parent=0 // pred_check
    _
  $region55: #{beso_forward.1} parent=0 // pred_check_branch
    %46 = sbr.rel (0) target = $region57
  $region56: #{beso_forward.1} parent=0 // pred_region
    _
  $region57: #{beso_forward.1} parent=0 // pred_fallthru
    _
  %v48 = vld [vmem:[%s0] sm:$0xf]
  %v49 = vld [vmem:[%s0 + $0x4] sm:$0xf]
  %v50 = vld [vmem:[%s0 + $0x8] sm:$0xf]
  %v51 = vld [vmem:[%s0 + $0xc] sm:$0xf]
  %v52 = vld [vmem:[%s0 + $0x10] sm:$0xf]
  %v53 = vld [vmem:[%s0 + $0x14] sm:$0xf]
  %v54 = vld [vmem:[%s0 + $0x18] sm:$0xf]
  %v55 = vld [vmem:[%s0 + $0x1c] sm:$0xf]
  %v56 = vld [vmem:[%s0 + $0x20] sm:$0xf]
  %v57 = vld [vmem:[%s0 + $0x24] sm:$0xf]
  %v58 = vld [vmem:[%s0 + $0x28] sm:$0xf]
  %v59 = vld [vmem:[%s0 + $0x2c] sm:$0xf]
  %v60 = vld [vmem:[%s0 + $0x30] sm:$0xf]
  %v61 = vld [vmem:[%s0 + $0x34] sm:$0xf]
  %v62 = vld [vmem:[%s0 + $0x38] sm:$0xf]
  %v63 = vld [vmem:[%s0 + $0x3c] sm:$0xf]
  %v64 = vld [vmem:[%s0 + $0x40] sm:$0xf]
  %v65 = vld [vmem:[%s0 + $0x44] sm:$0xf]
  %v66 = vld [vmem:[%s0 + $0x48] sm:$0xf]
  %v67 = vld [vmem:[%s0 + $0x4c] sm:$0xf]
  %v68 = vld [vmem:[%s0 + $0x50] sm:$0xf]
  %v69 = vld [vmem:[%s0 + $0x54] sm:$0xf]
  %v70 = vld [vmem:[%s0 + $0x58] sm:$0xf]
  %v71 = vld [vmem:[%s0 + $0x5c] sm:$0xf]
  %v72 = vld [vmem:[%s0 + $0x60] sm:$0xf]
  %v73 = vld [vmem:[%s0 + $0x64] sm:$0xf]
  %v74 = vld [vmem:[%s0 + $0x68] sm:$0xf]
  %v75 = vld [vmem:[%s0 + $0x6c] sm:$0xf]
  %v76 = vld [vmem:[%s0 + $0x70] sm:$0xf]
  %v77 = vld [vmem:[%s0 + $0x74] sm:$0xf]
  %v78 = vld [vmem:[%s0 + $0x78] sm:$0xf]
  %v79 = vld [vmem:[%s0 + $0x7c] sm:$0xf]
  %v80 = vld [vmem:[%s0 + $0x80] sm:$0xf]
  %v81 = vld [vmem:[%s0 + $0x84] sm:$0xf]
  %v82 = vld [vmem:[%s0 + $0x88] sm:$0xf]
  %v83 = vld [vmem:[%s0 + $0x8c] sm:$0xf]
  %v84 = vld [vmem:[%s0 + $0x90] sm:$0xf]
  %v85 = vld [vmem:[%s0 + $0x94] sm:$0xf]
  %v86 = vld [vmem:[%s0 + $0x98] sm:$0xf]
  %v87 = vld [vmem:[%s0 + $0x9c] sm:$0xf]
  %v88 = vld [vmem:[%s0 + $0xa0] sm:$0xf]
  %v89 = vld [vmem:[%s0 + $0xa4] sm:$0xf]
  %v90 = vld [vmem:[%s0 + $0xa8] sm:$0xf]
  %v91 = vld [vmem:[%s0 + $0xac] sm:$0xf]
  %v92 = vld [vmem:[%s0 + $0xb0] sm:$0xf]
  %v93 = vld [vmem:[%s0 + $0xb4] sm:$0xf]
  %v94 = vld [vmem:[%s0 + $0xb8] sm:$0xf]
  %v95 = vld [vmem:[%s0 + $0xbc] sm:$0xf]
  %v96 = vld [vmem:[%s0 + $0xc0] sm:$0xf]
  %v97 = vld [vmem:[%s0 + $0xc4] sm:$0xf]
  %v98 = vld [vmem:[%s0 + $0xc8] sm:$0xf]
  %v99 = vld [vmem:[%s0 + $0xcc] sm:$0xf]
  %v100 = vld [vmem:[%s0 + $0xd0] sm:$0xf]
  %v101 = vld [vmem:[%s0 + $0xd4] sm:$0xf]
  %v102 = vld [vmem:[%s0 + $0xd8] sm:$0xf]
  %v103 = vld [vmem:[%s0 + $0xdc] sm:$0xf]
  %v104 = vld [vmem:[%s0 + $0xe0] sm:$0xf]
  %v105 = vld [vmem:[%s0 + $0xe4] sm:$0xf]
  %v106 = vld [vmem:[%s0 + $0xe8] sm:$0xf]
  %v107 = vld [vmem:[%s0 + $0xec] sm:$0xf]
  %v108 = vld [vmem:[%s0 + $0xf0] sm:$0xf]
  %v109 = vld [vmem:[%s0 + $0xf4] sm:$0xf]
  %v110 = vld [vmem:[%s0 + $0xf8] sm:$0xf]
  %v111 = vld [vmem:[%s0 + $0xfc] sm:$0xf]
  %v112 = vld [vmem:[%s0 + $0x100] sm:$0xf]
  %v113 = vld [vmem:[%s0 + $0x104] sm:$0xf]
  %v114 = vld [vmem:[%s0 + $0x108] sm:$0xf]
  %v115 = vld [vmem:[%s0 + $0x10c] sm:$0xf]
  %v116 = vld [vmem:[%s0 + $0x110] sm:$0xf]
  %v117 = vld [vmem:[%s0 + $0x114] sm:$0xf]
  %v118 = vld [vmem:[%s0 + $0x118] sm:$0xf]
  %v119 = vld [vmem:[%s0 + $0x11c] sm:$0xf]
  %v120 = vld [vmem:[%s0 + $0x120] sm:$0xf]
  %v121 = vld [vmem:[%s0 + $0x124] sm:$0xf]
  %v122 = vld [vmem:[%s0 + $0x128] sm:$0xf]
  %v123 = vld [vmem:[%s0 + $0x12c] sm:$0xf]
  %v124 = vld [vmem:[%s0 + $0x130] sm:$0xf]
  %v125 = vld [vmem:[%s0 + $0x134] sm:$0xf]
  %v126 = vld [vmem:[%s0 + $0x138] sm:$0xf]
  %v127 = vld [vmem:[%s0 + $0x13c] sm:$0xf]
  %v128 = vld [vmem:[%s0 + $0x140] sm:$0xf]
  %v129 = vld [vmem:[%s0 + $0x144] sm:$0xf]
  %v130 = vld [vmem:[%s0 + $0x148] sm:$0xf]
  %v131 = vld [vmem:[%s0 + $0x14c] sm:$0xf]
  %v132 = vld [vmem:[%s0 + $0x150] sm:$0xf]
  %v133 = vld [vmem:[%s0 + $0x154] sm:$0xf]
  %v134 = vld [vmem:[%s0 + $0x158] sm:$0xf]
  %v135 = vld [vmem:[%s0 + $0x15c] sm:$0xf]
  %v136 = vld [vmem:[%s0 + $0x160] sm:$0xf]
  %v137 = vld [vmem:[%s0 + $0x164] sm:$0xf]
  %v138 = vld [vmem:[%s0 + $0x168] sm:$0xf]
  %v139 = vld [vmem:[%s0 + $0x16c] sm:$0xf]
  %v140 = vld [vmem:[%s0 + $0x170] sm:$0xf]
  %v141 = vld [vmem:[%s0 + $0x174] sm:$0xf]
  %v142 = vld [vmem:[%s0 + $0x178] sm:$0xf]
  %v143 = vld [vmem:[%s0 + $0x17c] sm:$0xf]
  %v144 = vld [vmem:[%s0 + $0x180] sm:$0xf]
  %v145 = vld [vmem:[%s0 + $0x184] sm:$0xf]
  %v146 = vld [vmem:[%s0 + $0x188] sm:$0xf]
  %v147 = vld [vmem:[%s0 + $0x18c] sm:$0xf]
  %v148 = vld [vmem:[%s0 + $0x190] sm:$0xf]
  %v149 = vld [vmem:[%s0 + $0x194] sm:$0xf]
  %v150 = vld [vmem:[%s0 + $0x198] sm:$0xf]
  %v151 = vld [vmem:[%s0 + $0x19c] sm:$0xf]
  %v152 = vld [vmem:[%s0 + $0x1a0] sm:$0xf]
  %v153 = vld [vmem:[%s0 + $0x1a4] sm:$0xf]
  %v154 = vld [vmem:[%s0 + $0x1a8] sm:$0xf]
  %v155 = vld [vmem:[%s0 + $0x1ac] sm:$0xf]
  %v156 = vld [vmem:[%s0 + $0x1b0] sm:$0xf]
  %v157 = vld [vmem:[%s0 + $0x1b4] sm:$0xf]
  %v158 = vld [vmem:[%s0 + $0x1b8] sm:$0xf]
  %v159 = vld [vmem:[%s0 + $0x1bc] sm:$0xf]
  %v160 = vld [vmem:[%s0 + $0x1c0] sm:$0xf]
  %v161 = vld [vmem:[%s0 + $0x1c4] sm:$0xf]
  %v162 = vld [vmem:[%s0 + $0x1c8] sm:$0xf]
  %v163 = vld [vmem:[%s0 + $0x1cc] sm:$0xf]
  %v164 = vld [vmem:[%s0 + $0x1d0] sm:$0xf]
  %v165 = vld [vmem:[%s0 + $0x1d4] sm:$0xf]
  %v166 = vld [vmem:[%s0 + $0x1d8] sm:$0xf]
  %v167 = vld [vmem:[%s0 + $0x1dc] sm:$0xf]
  %v168 = vld [vmem:[%s0 + $0x1e0] sm:$0xf]
  %v169 = vld [vmem:[%s0 + $0x1e4] sm:$0xf]
  %v170 = vld [vmem:[%s0 + $0x1e8] sm:$0xf]
  %v171 = vld [vmem:[%s0 + $0x1ec] sm:$0xf]
  %v172 = vld [vmem:[%s0 + $0x1f0] sm:$0xf]
  %v173 = vld [vmem:[%s0 + $0x1f4] sm:$0xf]
  %v174 = vld [vmem:[%s0 + $0x1f8] sm:$0xf]
  %v175 = vld [vmem:[%s0 + $0x1fc] sm:$0xf]
  %v176 = vld [vmem:[%s1] sm:$0xf]
  %v177 = vld [vmem:[%s1 + $0x4] sm:$0xf]
  %v178 = vld [vmem:[%s1 + $0x8] sm:$0xf]
  %v179 = vld [vmem:[%s1 + $0xc] sm:$0xf]
  %v180 = vld [vmem:[%s2] sm:$0x1]
  %v182 = vperm.slane %v180, 0
  %v312 = vunpack.c.l.b16 %v48
  %v313 = vunpack.c.l.b16 %v49
  %v314 = vunpack.c.l.b16 %v50
  %v315 = vunpack.c.l.b16 %v51
  %v316 = vunpack.c.l.b16 %v52
  %v317 = vunpack.c.l.b16 %v53
  %v318 = vunpack.c.l.b16 %v54
  %v319 = vunpack.c.l.b16 %v55
  %v320 = vunpack.c.l.b16 %v56
  %v321 = vunpack.c.l.b16 %v57
  %v322 = vunpack.c.l.b16 %v58
  %v323 = vunpack.c.l.b16 %v59
  %v324 = vunpack.c.l.b16 %v60
  %v325 = vunpack.c.l.b16 %v61
  %v326 = vunpack.c.l.b16 %v62
  %v327 = vunpack.c.l.b16 %v63
  %v328 = vunpack.c.l.b16 %v64
  %v329 = vunpack.c.l.b16 %v65
  %v330 = vunpack.c.l.b16 %v66
  %v331 = vunpack.c.l.b16 %v67
  %v332 = vunpack.c.l.b16 %v68
  %v333 = vunpack.c.l.b16 %v69
  %v334 = vunpack.c.l.b16 %v70
  %v335 = vunpack.c.l.b16 %v71
  %v336 = vunpack.c.l.b16 %v72
  %v337 = vunpack.c.l.b16 %v73
  %v338 = vunpack.c.l.b16 %v74
  %v339 = vunpack.c.l.b16 %v75
  %v340 = vunpack.c.l.b16 %v76
  %v341 = vunpack.c.l.b16 %v77
  %v342 = vunpack.c.l.b16 %v78
  %v343 = vunpack.c.l.b16 %v79
  %v344 = vunpack.c.l.b16 %v80
  %v345 = vunpack.c.l.b16 %v81
  %v346 = vunpack.c.l.b16 %v82
  %v347 = vunpack.c.l.b16 %v83
  %v348 = vunpack.c.l.b16 %v84
  %v349 = vunpack.c.l.b16 %v85
  %v350 = vunpack.c.l.b16 %v86
  %v351 = vunpack.c.l.b16 %v87
  %v352 = vunpack.c.l.b16 %v88
  %v353 = vunpack.c.l.b16 %v89
  %v354 = vunpack.c.l.b16 %v90
  %v355 = vunpack.c.l.b16 %v91
  %v356 = vunpack.c.l.b16 %v92
  %v357 = vunpack.c.l.b16 %v93
  %v358 = vunpack.c.l.b16 %v94
  %v359 = vunpack.c.l.b16 %v95
  %v360 = vunpack.c.l.b16 %v96
  %v361 = vunpack.c.l.b16 %v97
  %v362 = vunpack.c.l.b16 %v98
  %v363 = vunpack.c.l.b16 %v99
  %v364 = vunpack.c.l.b16 %v100
  %v365 = vunpack.c.l.b16 %v101
  %v366 = vunpack.c.l.b16 %v102
  %v367 = vunpack.c.l.b16 %v103
  %v368 = vunpack.c.l.b16 %v104
  %v369 = vunpack.c.l.b16 %v105
  %v370 = vunpack.c.l.b16 %v106
  %v371 = vunpack.c.l.b16 %v107
  %v372 = vunpack.c.l.b16 %v108
  %v373 = vunpack.c.l.b16 %v109
  %v374 = vunpack.c.l.b16 %v110
  %v375 = vunpack.c.l.b16 %v111
  %v376 = vunpack.c.l.b16 %v112
  %v377 = vunpack.c.l.b16 %v113
  %v378 = vunpack.c.l.b16 %v114
  %v379 = vunpack.c.l.b16 %v115
  %v380 = vunpack.c.l.b16 %v116
  %v381 = vunpack.c.l.b16 %v117
  %v382 = vunpack.c.l.b16 %v118
  %v383 = vunpack.c.l.b16 %v119
  %v384 = vunpack.c.l.b16 %v120
  %v385 = vunpack.c.l.b16 %v121
  %v386 = vunpack.c.l.b16 %v122
  %v387 = vunpack.c.l.b16 %v123
  %v388 = vunpack.c.l.b16 %v124
  %v389 = vunpack.c.l.b16 %v125
  %v390 = vunpack.c.l.b16 %v126
  %v391 = vunpack.c.l.b16 %v127
  %v392 = vunpack.c.l.b16 %v128
  %v393 = vunpack.c.l.b16 %v129
  %v394 = vunpack.c.l.b16 %v130
  %v395 = vunpack.c.l.b16 %v131
  %v396 = vunpack.c.l.b16 %v132
  %v397 = vunpack.c.l.b16 %v133
  %v398 = vunpack.c.l.b16 %v134
  %v399 = vunpack.c.l.b16 %v135
  %v400 = vunpack.c.l.b16 %v136
  %v401 = vunpack.c.l.b16 %v137
  %v402 = vunpack.c.l.b16 %v138
  %v403 = vunpack.c.l.b16 %v139
  %v404 = vunpack.c.l.b16 %v140
  %v405 = vunpack.c.l.b16 %v141
  %v406 = vunpack.c.l.b16 %v142
  %v407 = vunpack.c.l.b16 %v143
  %v408 = vunpack.c.l.b16 %v144
  %v409 = vunpack.c.l.b16 %v145
  %v410 = vunpack.c.l.b16 %v146
  %v411 = vunpack.c.l.b16 %v147
  %v412 = vunpack.c.l.b16 %v148
  %v413 = vunpack.c.l.b16 %v149
  %v414 = vunpack.c.l.b16 %v150
  %v415 = vunpack.c.l.b16 %v151
  %v416 = vunpack.c.l.b16 %v152
  %v417 = vunpack.c.l.b16 %v153
  %v418 = vunpack.c.l.b16 %v154
  %v419 = vunpack.c.l.b16 %v155
  %v420 = vunpack.c.l.b16 %v156
  %v421 = vunpack.c.l.b16 %v157
  %v422 = vunpack.c.l.b16 %v158
  %v423 = vunpack.c.l.b16 %v159
  %v424 = vunpack.c.l.b16 %v160
  %v425 = vunpack.c.l.b16 %v161
  %v426 = vunpack.c.l.b16 %v162
  %v427 = vunpack.c.l.b16 %v163
  %v428 = vunpack.c.l.b16 %v164
  %v429 = vunpack.c.l.b16 %v165
  %v430 = vunpack.c.l.b16 %v166
  %v431 = vunpack.c.l.b16 %v167
  %v432 = vunpack.c.l.b16 %v168
  %v433 = vunpack.c.l.b16 %v169
  %v434 = vunpack.c.l.b16 %v170
  %v435 = vunpack.c.l.b16 %v171
  %v436 = vunpack.c.l.b16 %v172
  %v437 = vunpack.c.l.b16 %v173
  %v438 = vunpack.c.l.b16 %v174
  %v439 = vunpack.c.l.b16 %v175
  %v440 = vpack.c.b16 %v313, %v312
  %v441 = vpack.c.b16 %v315, %v314
  %v442 = vpack.c.b16 %v317, %v316
  %v443 = vpack.c.b16 %v319, %v318
  %v444 = vpack.c.b16 %v321, %v320
  %v445 = vpack.c.b16 %v323, %v322
  %v446 = vpack.c.b16 %v325, %v324
  %v447 = vpack.c.b16 %v327, %v326
  %v448 = vpack.c.b16 %v329, %v328
  %v449 = vpack.c.b16 %v331, %v330
  %v450 = vpack.c.b16 %v333, %v332
  %v451 = vpack.c.b16 %v335, %v334
  %v452 = vpack.c.b16 %v337, %v336
  %v453 = vpack.c.b16 %v339, %v338
  %v454 = vpack.c.b16 %v341, %v340
  %v455 = vpack.c.b16 %v343, %v342
  %v456 = vpack.c.b16 %v345, %v344
  %v457 = vpack.c.b16 %v347, %v346
  %v458 = vpack.c.b16 %v349, %v348
  %v459 = vpack.c.b16 %v351, %v350
  %v460 = vpack.c.b16 %v353, %v352
  %v461 = vpack.c.b16 %v355, %v354
  %v462 = vpack.c.b16 %v357, %v356
  %v463 = vpack.c.b16 %v359, %v358
  %v464 = vpack.c.b16 %v361, %v360
  %v465 = vpack.c.b16 %v363, %v362
  %v466 = vpack.c.b16 %v365, %v364
  %v467 = vpack.c.b16 %v367, %v366
  %v468 = vpack.c.b16 %v369, %v368
  %v469 = vpack.c.b16 %v371, %v370
  %v470 = vpack.c.b16 %v373, %v372
  %v471 = vpack.c.b16 %v375, %v374
  %v472 = vpack.c.b16 %v377, %v376
  %v473 = vpack.c.b16 %v379, %v378
  %v474 = vpack.c.b16 %v381, %v380
  %v475 = vpack.c.b16 %v383, %v382
  %v476 = vpack.c.b16 %v385, %v384
  %v477 = vpack.c.b16 %v387, %v386
  %v478 = vpack.c.b16 %v389, %v388
  %v479 = vpack.c.b16 %v391, %v390
  %v480 = vpack.c.b16 %v393, %v392
  %v481 = vpack.c.b16 %v395, %v394
  %v482 = vpack.c.b16 %v397, %v396
  %v483 = vpack.c.b16 %v399, %v398
  %v484 = vpack.c.b16 %v401, %v400
  %v485 = vpack.c.b16 %v403, %v402
  %v486 = vpack.c.b16 %v405, %v404
  %v487 = vpack.c.b16 %v407, %v406
  %v488 = vpack.c.b16 %v409, %v408
  %v489 = vpack.c.b16 %v411, %v410
  %v490 = vpack.c.b16 %v413, %v412
  %v491 = vpack.c.b16 %v415, %v414
  %v492 = vpack.c.b16 %v417, %v416
  %v493 = vpack.c.b16 %v419, %v418
  %v494 = vpack.c.b16 %v421, %v420
  %v495 = vpack.c.b16 %v423, %v422
  %v496 = vpack.c.b16 %v425, %v424
  %v497 = vpack.c.b16 %v427, %v426
  %v498 = vpack.c.b16 %v429, %v428
  %v499 = vpack.c.b16 %v431, %v430
  %v500 = vpack.c.b16 %v433, %v432
  %v501 = vpack.c.b16 %v435, %v434
  %v502 = vpack.c.b16 %v437, %v436
  %v503 = vpack.c.b16 %v439, %v438
  %v508 = vunpack.c.l.b16 %v176
  %v509 = vunpack.c.l.b16 %v177
  %v510 = vunpack.c.l.b16 %v178
  %v511 = vunpack.c.l.b16 %v179
  %v512 = vpack.c.b16 %v509, %v508
  %v513 = vpack.c.b16 %v511, %v510
  %vm516 = vcmask 261120
  %v518 = vsel %vm516, %v440, 0
  %v521 = vsel %vm516, %v441, 0
  %v524 = vsel %vm516, %v442, 0
  %v527 = vsel %vm516, %v443, 0
  %v530 = vsel %vm516, %v444, 0
  %v533 = vsel %vm516, %v445, 0
  %v536 = vsel %vm516, %v446, 0
  %v539 = vsel %vm516, %v447, 0
  %v542 = vsel %vm516, %v448, 0
  %v545 = vsel %vm516, %v449, 0
  %v548 = vsel %vm516, %v450, 0
  %v551 = vsel %vm516, %v451, 0
  %v554 = vsel %vm516, %v452, 0
  %v557 = vsel %vm516, %v453, 0
  %v560 = vsel %vm516, %v454, 0
  %v563 = vsel %vm516, %v455, 0
  %v566 = vsel %vm516, %v456, 0
  %v569 = vsel %vm516, %v457, 0
  %v572 = vsel %vm516, %v458, 0
  %v575 = vsel %vm516, %v459, 0
  %v578 = vsel %vm516, %v460, 0
  %v581 = vsel %vm516, %v461, 0
  %v584 = vsel %vm516, %v462, 0
  %v587 = vsel %vm516, %v463, 0
  %v590 = vsel %vm516, %v464, 0
  %v593 = vsel %vm516, %v465, 0
  %v596 = vsel %vm516, %v466, 0
  %v599 = vsel %vm516, %v467, 0
  %v602 = vsel %vm516, %v468, 0
  %v605 = vsel %vm516, %v469, 0
  %v608 = vsel %vm516, %v470, 0
  %v611 = vsel %vm516, %v471, 0
  %v614 = vsel %vm516, %v472, 0
  %v617 = vsel %vm516, %v473, 0
  %v620 = vsel %vm516, %v474, 0
  %v623 = vsel %vm516, %v475, 0
  %v626 = vsel %vm516, %v476, 0
  %v629 = vsel %vm516, %v477, 0
  %v632 = vsel %vm516, %v478, 0
  %v635 = vsel %vm516, %v479, 0
  %v638 = vsel %vm516, %v480, 0
  %v641 = vsel %vm516, %v481, 0
  %v644 = vsel %vm516, %v482, 0
  %v647 = vsel %vm516, %v483, 0
  %v650 = vsel %vm516, %v484, 0
  %v653 = vsel %vm516, %v485, 0
  %v656 = vsel %vm516, %v486, 0
  %v659 = vsel %vm516, %v487, 0
  %v662 = vsel %vm516, %v488, 0
  %v665 = vsel %vm516, %v489, 0
  %v668 = vsel %vm516, %v490, 0
  %v671 = vsel %vm516, %v491, 0
  %v674 = vsel %vm516, %v492, 0
  %v677 = vsel %vm516, %v493, 0
  %v680 = vsel %vm516, %v494, 0
  %v683 = vsel %vm516, %v495, 0
  %v686 = vsel %vm516, %v496, 0
  %v689 = vsel %vm516, %v497, 0
  %v692 = vsel %vm516, %v498, 0
  %v695 = vsel %vm516, %v499, 0
  %v698 = vsel %vm516, %v500, 0
  %v701 = vsel %vm516, %v501, 0
  %v704 = vsel %vm516, %v502, 0
  %v707 = vsel %vm516, %v503, 0
  %709 = vmatpush.bf16.msra.mxu0 0
  %710 = vmatpush.bf16.msra.mxu0 0
  %711 = vmatpush.bf16.msra.mxu0 0
  %712 = vmatpush.bf16.msra.mxu0 0
  %713 = vmatpush.bf16.msra.mxu0 0
  %714 = vmatpush.bf16.msra.mxu0 0
  %715 = vmatpush.bf16.msra.mxu0 %v513
  %716 = vmatpush.bf16.msra.mxu0 %v512
  %717 = vmatmul.bf16.gmra.mxu0 %v518
  %v718 = vpop.f32.mrf.mxu0
  %v719 = vadd.f32 %v182, %v718
  %v720 = vpop.f32.mrf.mxu0
  %v721 = vadd.f32 %v182, %v720
  %722 = vmatmul.bf16.gmra.mxu0 %v521
  %v723 = vpop.f32.mrf.mxu0
  %v724 = vadd.f32 %v182, %v723
  %v725 = vpop.f32.mrf.mxu0
  %v726 = vadd.f32 %v182, %v725
  %727 = vmatmul.bf16.gmra.mxu0 %v524
  %v728 = vpop.f32.mrf.mxu0
  %v729 = vadd.f32 %v182, %v728
  %v730 = vpop.f32.mrf.mxu0
  %v731 = vadd.f32 %v182, %v730
  %732 = vmatmul.bf16.gmra.mxu0 %v527
  %v733 = vpop.f32.mrf.mxu0
  %v734 = vadd.f32 %v182, %v733
  %v735 = vpop.f32.mrf.mxu0
  %v736 = vadd.f32 %v182, %v735
  %737 = vmatmul.bf16.gmra.mxu0 %v530
  %v738 = vpop.f32.mrf.mxu0
  %v739 = vadd.f32 %v182, %v738
  %v740 = vpop.f32.mrf.mxu0
  %v741 = vadd.f32 %v182, %v740
  %742 = vmatmul.bf16.gmra.mxu0 %v533
  %v743 = vpop.f32.mrf.mxu0
  %v744 = vadd.f32 %v182, %v743
  %v745 = vpop.f32.mrf.mxu0
  %v746 = vadd.f32 %v182, %v745
  %747 = vmatmul.bf16.gmra.mxu0 %v536
  %v748 = vpop.f32.mrf.mxu0
  %v749 = vadd.f32 %v182, %v748
  %v750 = vpop.f32.mrf.mxu0
  %v751 = vadd.f32 %v182, %v750
  %752 = vmatmul.bf16.gmra.mxu0 %v539
  %v753 = vpop.f32.mrf.mxu0
  %v754 = vadd.f32 %v182, %v753
  %v755 = vpop.f32.mrf.mxu0
  %v756 = vadd.f32 %v182, %v755
  %757 = vmatmul.bf16.gmra.mxu0 %v542
  %v758 = vpop.f32.mrf.mxu0
  %v759 = vadd.f32 %v182, %v758
  %v760 = vpop.f32.mrf.mxu0
  %v761 = vadd.f32 %v182, %v760
  %762 = vmatmul.bf16.gmra.mxu0 %v545
  %v763 = vpop.f32.mrf.mxu0
  %v764 = vadd.f32 %v182, %v763
  %v765 = vpop.f32.mrf.mxu0
  %v766 = vadd.f32 %v182, %v765
  %767 = vmatmul.bf16.gmra.mxu0 %v548
  %v768 = vpop.f32.mrf.mxu0
  %v769 = vadd.f32 %v182, %v768
  %v770 = vpop.f32.mrf.mxu0
  %v771 = vadd.f32 %v182, %v770
  %772 = vmatmul.bf16.gmra.mxu0 %v551
  %v773 = vpop.f32.mrf.mxu0
  %v774 = vadd.f32 %v182, %v773
  %v775 = vpop.f32.mrf.mxu0
  %v776 = vadd.f32 %v182, %v775
  %777 = vmatmul.bf16.gmra.mxu0 %v554
  %v778 = vpop.f32.mrf.mxu0
  %v779 = vadd.f32 %v182, %v778
  %v780 = vpop.f32.mrf.mxu0
  %v781 = vadd.f32 %v182, %v780
  %782 = vmatmul.bf16.gmra.mxu0 %v557
  %v783 = vpop.f32.mrf.mxu0
  %v784 = vadd.f32 %v182, %v783
  %v785 = vpop.f32.mrf.mxu0
  %v786 = vadd.f32 %v182, %v785
  %787 = vmatmul.bf16.gmra.mxu0 %v560
  %v788 = vpop.f32.mrf.mxu0
  %v789 = vadd.f32 %v182, %v788
  %v790 = vpop.f32.mrf.mxu0
  %v791 = vadd.f32 %v182, %v790
  %792 = vmatmul.bf16.gmra.mxu0 %v563
  %v793 = vpop.f32.mrf.mxu0
  %v794 = vadd.f32 %v182, %v793
  %v795 = vpop.f32.mrf.mxu0
  %v796 = vadd.f32 %v182, %v795
  %797 = vmatmul.bf16.gmra.mxu0 %v566
  %v798 = vpop.f32.mrf.mxu0
  %v799 = vadd.f32 %v182, %v798
  %v800 = vpop.f32.mrf.mxu0
  %v801 = vadd.f32 %v182, %v800
  %802 = vmatmul.bf16.gmra.mxu0 %v569
  %v803 = vpop.f32.mrf.mxu0
  %v804 = vadd.f32 %v182, %v803
  %v805 = vpop.f32.mrf.mxu0
  %v806 = vadd.f32 %v182, %v805
  %807 = vmatmul.bf16.gmra.mxu0 %v572
  %v808 = vpop.f32.mrf.mxu0
  %v809 = vadd.f32 %v182, %v808
  %v810 = vpop.f32.mrf.mxu0
  %v811 = vadd.f32 %v182, %v810
  %812 = vmatmul.bf16.gmra.mxu0 %v575
  %v813 = vpop.f32.mrf.mxu0
  %v814 = vadd.f32 %v182, %v813
  %v815 = vpop.f32.mrf.mxu0
  %v816 = vadd.f32 %v182, %v815
  %817 = vmatmul.bf16.gmra.mxu0 %v578
  %v818 = vpop.f32.mrf.mxu0
  %v819 = vadd.f32 %v182, %v818
  %v820 = vpop.f32.mrf.mxu0
  %v821 = vadd.f32 %v182, %v820
  %822 = vmatmul.bf16.gmra.mxu0 %v581
  %v823 = vpop.f32.mrf.mxu0
  %v824 = vadd.f32 %v182, %v823
  %v825 = vpop.f32.mrf.mxu0
  %v826 = vadd.f32 %v182, %v825
  %827 = vmatmul.bf16.gmra.mxu0 %v584
  %v828 = vpop.f32.mrf.mxu0
  %v829 = vadd.f32 %v182, %v828
  %v830 = vpop.f32.mrf.mxu0
  %v831 = vadd.f32 %v182, %v830
  %832 = vmatmul.bf16.gmra.mxu0 %v587
  %v833 = vpop.f32.mrf.mxu0
  %v834 = vadd.f32 %v182, %v833
  %v835 = vpop.f32.mrf.mxu0
  %v836 = vadd.f32 %v182, %v835
  %837 = vmatmul.bf16.gmra.mxu0 %v590
  %v838 = vpop.f32.mrf.mxu0
  %v839 = vadd.f32 %v182, %v838
  %v840 = vpop.f32.mrf.mxu0
  %v841 = vadd.f32 %v182, %v840
  %842 = vmatmul.bf16.gmra.mxu0 %v593
  %v843 = vpop.f32.mrf.mxu0
  %v844 = vadd.f32 %v182, %v843
  %v845 = vpop.f32.mrf.mxu0
  %v846 = vadd.f32 %v182, %v845
  %847 = vmatmul.bf16.gmra.mxu0 %v596
  %v848 = vpop.f32.mrf.mxu0
  %v849 = vadd.f32 %v182, %v848
  %v850 = vpop.f32.mrf.mxu0
  %v851 = vadd.f32 %v182, %v850
  %852 = vmatmul.bf16.gmra.mxu0 %v599
  %v853 = vpop.f32.mrf.mxu0
  %v854 = vadd.f32 %v182, %v853
  %v855 = vpop.f32.mrf.mxu0
  %v856 = vadd.f32 %v182, %v855
  %857 = vmatmul.bf16.gmra.mxu0 %v602
  %v858 = vpop.f32.mrf.mxu0
  %v859 = vadd.f32 %v182, %v858
  %v860 = vpop.f32.mrf.mxu0
  %v861 = vadd.f32 %v182, %v860
  %862 = vmatmul.bf16.gmra.mxu0 %v605
  %v863 = vpop.f32.mrf.mxu0
  %v864 = vadd.f32 %v182, %v863
  %v865 = vpop.f32.mrf.mxu0
  %v866 = vadd.f32 %v182, %v865
  %867 = vmatmul.bf16.gmra.mxu0 %v608
  %v868 = vpop.f32.mrf.mxu0
  %v869 = vadd.f32 %v182, %v868
  %v870 = vpop.f32.mrf.mxu0
  %v871 = vadd.f32 %v182, %v870
  %872 = vmatmul.bf16.gmra.mxu0 %v611
  %v873 = vpop.f32.mrf.mxu0
  %v874 = vadd.f32 %v182, %v873
  %v875 = vpop.f32.mrf.mxu0
  %v876 = vadd.f32 %v182, %v875
  %877 = vmatmul.bf16.gmra.mxu0 %v614
  %v878 = vpop.f32.mrf.mxu0
  %v879 = vadd.f32 %v182, %v878
  %v880 = vpop.f32.mrf.mxu0
  %v881 = vadd.f32 %v182, %v880
  %882 = vmatmul.bf16.gmra.mxu0 %v617
  %v883 = vpop.f32.mrf.mxu0
  %v884 = vadd.f32 %v182, %v883
  %v885 = vpop.f32.mrf.mxu0
  %v886 = vadd.f32 %v182, %v885
  %887 = vmatmul.bf16.gmra.mxu0 %v620
  %v888 = vpop.f32.mrf.mxu0
  %v889 = vadd.f32 %v182, %v888
  %v890 = vpop.f32.mrf.mxu0
  %v891 = vadd.f32 %v182, %v890
  %892 = vmatmul.bf16.gmra.mxu0 %v623
  %v893 = vpop.f32.mrf.mxu0
  %v894 = vadd.f32 %v182, %v893
  %v895 = vpop.f32.mrf.mxu0
  %v896 = vadd.f32 %v182, %v895
  %897 = vmatmul.bf16.gmra.mxu0 %v626
  %v898 = vpop.f32.mrf.mxu0
  %v899 = vadd.f32 %v182, %v898
  %v900 = vpop.f32.mrf.mxu0
  %v901 = vadd.f32 %v182, %v900
  %902 = vmatmul.bf16.gmra.mxu0 %v629
  %v903 = vpop.f32.mrf.mxu0
  %v904 = vadd.f32 %v182, %v903
  %v905 = vpop.f32.mrf.mxu0
  %v906 = vadd.f32 %v182, %v905
  %907 = vmatmul.bf16.gmra.mxu0 %v632
  %v908 = vpop.f32.mrf.mxu0
  %v909 = vadd.f32 %v182, %v908
  %v910 = vpop.f32.mrf.mxu0
  %v911 = vadd.f32 %v182, %v910
  %912 = vmatmul.bf16.gmra.mxu0 %v635
  %v913 = vpop.f32.mrf.mxu0
  %v914 = vadd.f32 %v182, %v913
  %v915 = vpop.f32.mrf.mxu0
  %v916 = vadd.f32 %v182, %v915
  %917 = vmatmul.bf16.gmra.mxu0 %v638
  %v918 = vpop.f32.mrf.mxu0
  %v919 = vadd.f32 %v182, %v918
  %v920 = vpop.f32.mrf.mxu0
  %v921 = vadd.f32 %v182, %v920
  %922 = vmatmul.bf16.gmra.mxu0 %v641
  %v923 = vpop.f32.mrf.mxu0
  %v924 = vadd.f32 %v182, %v923
  %v925 = vpop.f32.mrf.mxu0
  %v926 = vadd.f32 %v182, %v925
  %927 = vmatmul.bf16.gmra.mxu0 %v644
  %v928 = vpop.f32.mrf.mxu0
  %v929 = vadd.f32 %v182, %v928
  %v930 = vpop.f32.mrf.mxu0
  %v931 = vadd.f32 %v182, %v930
  %932 = vmatmul.bf16.gmra.mxu0 %v647
  %v933 = vpop.f32.mrf.mxu0
  %v934 = vadd.f32 %v182, %v933
  %v935 = vpop.f32.mrf.mxu0
  %v936 = vadd.f32 %v182, %v935
  %937 = vmatmul.bf16.gmra.mxu0 %v650
  %v938 = vpop.f32.mrf.mxu0
  %v939 = vadd.f32 %v182, %v938
  %v940 = vpop.f32.mrf.mxu0
  %v941 = vadd.f32 %v182, %v940
  %942 = vmatmul.bf16.gmra.mxu0 %v653
  %v943 = vpop.f32.mrf.mxu0
  %v944 = vadd.f32 %v182, %v943
  %v945 = vpop.f32.mrf.mxu0
  %v946 = vadd.f32 %v182, %v945
  %947 = vmatmul.bf16.gmra.mxu0 %v656
  %v948 = vpop.f32.mrf.mxu0
  %v949 = vadd.f32 %v182, %v948
  %v950 = vpop.f32.mrf.mxu0
  %v951 = vadd.f32 %v182, %v950
  %952 = vmatmul.bf16.gmra.mxu0 %v659
  %v953 = vpop.f32.mrf.mxu0
  %v954 = vadd.f32 %v182, %v953
  %v955 = vpop.f32.mrf.mxu0
  %v956 = vadd.f32 %v182, %v955
  %957 = vmatmul.bf16.gmra.mxu0 %v662
  %v958 = vpop.f32.mrf.mxu0
  %v959 = vadd.f32 %v182, %v958
  %v960 = vpop.f32.mrf.mxu0
  %v961 = vadd.f32 %v182, %v960
  %962 = vmatmul.bf16.gmra.mxu0 %v665
  %v963 = vpop.f32.mrf.mxu0
  %v964 = vadd.f32 %v182, %v963
  %v965 = vpop.f32.mrf.mxu0
  %v966 = vadd.f32 %v182, %v965
  %967 = vmatmul.bf16.gmra.mxu0 %v668
  %v968 = vpop.f32.mrf.mxu0
  %v969 = vadd.f32 %v182, %v968
  %v970 = vpop.f32.mrf.mxu0
  %v971 = vadd.f32 %v182, %v970
  %972 = vmatmul.bf16.gmra.mxu0 %v671
  %v973 = vpop.f32.mrf.mxu0
  %v974 = vadd.f32 %v182, %v973
  %v975 = vpop.f32.mrf.mxu0
  %v976 = vadd.f32 %v182, %v975
  %977 = vmatmul.bf16.gmra.mxu0 %v674
  %v978 = vpop.f32.mrf.mxu0
  %v979 = vadd.f32 %v182, %v978
  %v980 = vpop.f32.mrf.mxu0
  %v981 = vadd.f32 %v182, %v980
  %982 = vmatmul.bf16.gmra.mxu0 %v677
  %v983 = vpop.f32.mrf.mxu0
  %v984 = vadd.f32 %v182, %v983
  %v985 = vpop.f32.mrf.mxu0
  %v986 = vadd.f32 %v182, %v985
  %987 = vmatmul.bf16.gmra.mxu0 %v680
  %v988 = vpop.f32.mrf.mxu0
  %v989 = vadd.f32 %v182, %v988
  %v990 = vpop.f32.mrf.mxu0
  %v991 = vadd.f32 %v182, %v990
  %992 = vmatmul.bf16.gmra.mxu0 %v683
  %v993 = vpop.f32.mrf.mxu0
  %v994 = vadd.f32 %v182, %v993
  %v995 = vpop.f32.mrf.mxu0
  %v996 = vadd.f32 %v182, %v995
  %997 = vmatmul.bf16.gmra.mxu0 %v686
  %v998 = vpop.f32.mrf.mxu0
  %v999 = vadd.f32 %v182, %v998
  %v1000 = vpop.f32.mrf.mxu0
  %v1001 = vadd.f32 %v182, %v1000
  %1002 = vmatmul.bf16.gmra.mxu0 %v689
  %v1003 = vpop.f32.mrf.mxu0
  %v1004 = vadd.f32 %v182, %v1003
  %v1005 = vpop.f32.mrf.mxu0
  %v1006 = vadd.f32 %v182, %v1005
  %1007 = vmatmul.bf16.gmra.mxu0 %v692
  %v1008 = vpop.f32.mrf.mxu0
  %v1009 = vadd.f32 %v182, %v1008
  %v1010 = vpop.f32.mrf.mxu0
  %v1011 = vadd.f32 %v182, %v1010
  %1012 = vmatmul.bf16.gmra.mxu0 %v695
  %v1013 = vpop.f32.mrf.mxu0
  %v1014 = vadd.f32 %v182, %v1013
  %v1015 = vpop.f32.mrf.mxu0
  %v1016 = vadd.f32 %v182, %v1015
  %1017 = vmatmul.bf16.gmra.mxu0 %v698
  %v1018 = vpop.f32.mrf.mxu0
  %v1019 = vadd.f32 %v182, %v1018
  %v1020 = vpop.f32.mrf.mxu0
  %v1021 = vadd.f32 %v182, %v1020
  %1022 = vmatmul.bf16.gmra.mxu0 %v701
  %v1023 = vpop.f32.mrf.mxu0
  %v1024 = vadd.f32 %v182, %v1023
  %v1025 = vpop.f32.mrf.mxu0
  %v1026 = vadd.f32 %v182, %v1025
  %1027 = vmatmul.bf16.gmra.mxu0 %v704
  %v1028 = vpop.f32.mrf.mxu0
  %v1029 = vadd.f32 %v182, %v1028
  %v1030 = vpop.f32.mrf.mxu0
  %v1031 = vadd.f32 %v182, %v1030
  %1032 = vmatmul.bf16.gmra.mxu0 %v707
  %v1033 = vpop.f32.mrf.mxu0
  %v1034 = vadd.f32 %v182, %v1033
  %v1035 = vpop.f32.mrf.mxu0
  %v1036 = vadd.f32 %v182, %v1035
  %1037 = vdwg.mxu0
  %v1038 = vmax.f32 %v719, 0.0
  %v1039 = vmax.f32 %v721, 0.0
  %v1040 = vmax.f32 %v724, 0.0
  %v1041 = vmax.f32 %v726, 0.0
  %v1042 = vmax.f32 %v729, 0.0
  %v1043 = vmax.f32 %v731, 0.0
  %v1044 = vmax.f32 %v734, 0.0
  %v1045 = vmax.f32 %v736, 0.0
  %v1046 = vmax.f32 %v739, 0.0
  %v1047 = vmax.f32 %v741, 0.0
  %v1048 = vmax.f32 %v744, 0.0
  %v1049 = vmax.f32 %v746, 0.0
  %v1050 = vmax.f32 %v749, 0.0
  %v1051 = vmax.f32 %v751, 0.0
  %v1052 = vmax.f32 %v754, 0.0
  %v1053 = vmax.f32 %v756, 0.0
  %v1054 = vmax.f32 %v759, 0.0
  %v1055 = vmax.f32 %v761, 0.0
  %v1056 = vmax.f32 %v764, 0.0
  %v1057 = vmax.f32 %v766, 0.0
  %v1058 = vmax.f32 %v769, 0.0
  %v1059 = vmax.f32 %v771, 0.0
  %v1060 = vmax.f32 %v774, 0.0
  %v1061 = vmax.f32 %v776, 0.0
  %v1062 = vmax.f32 %v779, 0.0
  %v1063 = vmax.f32 %v781, 0.0
  %v1064 = vmax.f32 %v784, 0.0
  %v1065 = vmax.f32 %v786, 0.0
  %v1066 = vmax.f32 %v789, 0.0
  %v1067 = vmax.f32 %v791, 0.0
  %v1068 = vmax.f32 %v794, 0.0
  %v1069 = vmax.f32 %v796, 0.0
  %v1070 = vmax.f32 %v799, 0.0
  %v1071 = vmax.f32 %v801, 0.0
  %v1072 = vmax.f32 %v804, 0.0
  %v1073 = vmax.f32 %v806, 0.0
  %v1074 = vmax.f32 %v809, 0.0
  %v1075 = vmax.f32 %v811, 0.0
  %v1076 = vmax.f32 %v814, 0.0
  %v1077 = vmax.f32 %v816, 0.0
  %v1078 = vmax.f32 %v819, 0.0
  %v1079 = vmax.f32 %v821, 0.0
  %v1080 = vmax.f32 %v824, 0.0
  %v1081 = vmax.f32 %v826, 0.0
  %v1082 = vmax.f32 %v829, 0.0
  %v1083 = vmax.f32 %v831, 0.0
  %v1084 = vmax.f32 %v834, 0.0
  %v1085 = vmax.f32 %v836, 0.0
  %v1086 = vmax.f32 %v839, 0.0
  %v1087 = vmax.f32 %v841, 0.0
  %v1088 = vmax.f32 %v844, 0.0
  %v1089 = vmax.f32 %v846, 0.0
  %v1090 = vmax.f32 %v849, 0.0
  %v1091 = vmax.f32 %v851, 0.0
  %v1092 = vmax.f32 %v854, 0.0
  %v1093 = vmax.f32 %v856, 0.0
  %v1094 = vmax.f32 %v859, 0.0
  %v1095 = vmax.f32 %v861, 0.0
  %v1096 = vmax.f32 %v864, 0.0
  %v1097 = vmax.f32 %v866, 0.0
  %v1098 = vmax.f32 %v869, 0.0
  %v1099 = vmax.f32 %v871, 0.0
  %v1100 = vmax.f32 %v874, 0.0
  %v1101 = vmax.f32 %v876, 0.0
  %v1102 = vmax.f32 %v879, 0.0
  %v1103 = vmax.f32 %v881, 0.0
  %v1104 = vmax.f32 %v884, 0.0
  %v1105 = vmax.f32 %v886, 0.0
  %v1106 = vmax.f32 %v889, 0.0
  %v1107 = vmax.f32 %v891, 0.0
  %v1108 = vmax.f32 %v894, 0.0
  %v1109 = vmax.f32 %v896, 0.0
  %v1110 = vmax.f32 %v899, 0.0
  %v1111 = vmax.f32 %v901, 0.0
  %v1112 = vmax.f32 %v904, 0.0
  %v1113 = vmax.f32 %v906, 0.0
  %v1114 = vmax.f32 %v909, 0.0
  %v1115 = vmax.f32 %v911, 0.0
  %v1116 = vmax.f32 %v914, 0.0
  %v1117 = vmax.f32 %v916, 0.0
  %v1118 = vmax.f32 %v919, 0.0
  %v1119 = vmax.f32 %v921, 0.0
  %v1120 = vmax.f32 %v924, 0.0
  %v1121 = vmax.f32 %v926, 0.0
  %v1122 = vmax.f32 %v929, 0.0
  %v1123 = vmax.f32 %v931, 0.0
  %v1124 = vmax.f32 %v934, 0.0
  %v1125 = vmax.f32 %v936, 0.0
  %v1126 = vmax.f32 %v939, 0.0
  %v1127 = vmax.f32 %v941, 0.0
  %v1128 = vmax.f32 %v944, 0.0
  %v1129 = vmax.f32 %v946, 0.0
  %v1130 = vmax.f32 %v949, 0.0
  %v1131 = vmax.f32 %v951, 0.0
  %v1132 = vmax.f32 %v954, 0.0
  %v1133 = vmax.f32 %v956, 0.0
  %v1134 = vmax.f32 %v959, 0.0
  %v1135 = vmax.f32 %v961, 0.0
  %v1136 = vmax.f32 %v964, 0.0
  %v1137 = vmax.f32 %v966, 0.0
  %v1138 = vmax.f32 %v969, 0.0
  %v1139 = vmax.f32 %v971, 0.0
  %v1140 = vmax.f32 %v974, 0.0
  %v1141 = vmax.f32 %v976, 0.0
  %v1142 = vmax.f32 %v979, 0.0
  %v1143 = vmax.f32 %v981, 0.0
  %v1144 = vmax.f32 %v984, 0.0
  %v1145 = vmax.f32 %v986, 0.0
  %v1146 = vmax.f32 %v989, 0.0
  %v1147 = vmax.f32 %v991, 0.0
  %v1148 = vmax.f32 %v994, 0.0
  %v1149 = vmax.f32 %v996, 0.0
  %v1150 = vmax.f32 %v999, 0.0
  %v1151 = vmax.f32 %v1001, 0.0
  %v1152 = vmax.f32 %v1004, 0.0
  %v1153 = vmax.f32 %v1006, 0.0
  %v1154 = vmax.f32 %v1009, 0.0
  %v1155 = vmax.f32 %v1011, 0.0
  %v1156 = vmax.f32 %v1014, 0.0
  %v1157 = vmax.f32 %v1016, 0.0
  %v1158 = vmax.f32 %v1019, 0.0
  %v1159 = vmax.f32 %v1021, 0.0
  %v1160 = vmax.f32 %v1024, 0.0
  %v1161 = vmax.f32 %v1026, 0.0
  %v1162 = vmax.f32 %v1029, 0.0
  %v1163 = vmax.f32 %v1031, 0.0
  %v1164 = vmax.f32 %v1034, 0.0
  %v1165 = vmax.f32 %v1036, 0.0
  %v1166 = vadd.f32 %v1038, %v1039
  %v1167 = vadd.f32 %v1166, %v1040
  %v1168 = vadd.f32 %v1167, %v1041
  %v1169 = vadd.f32 %v1168, %v1042
  %v1170 = vadd.f32 %v1169, %v1043
  %v1171 = vadd.f32 %v1170, %v1044
  %v1172 = vadd.f32 %v1171, %v1045
  %v1173 = vadd.f32 %v1172, %v1046
  %v1174 = vadd.f32 %v1173, %v1047
  %v1175 = vadd.f32 %v1174, %v1048
  %v1176 = vadd.f32 %v1175, %v1049
  %v1177 = vadd.f32 %v1176, %v1050
  %v1178 = vadd.f32 %v1177, %v1051
  %v1179 = vadd.f32 %v1178, %v1052
  %v1180 = vadd.f32 %v1179, %v1053
  %v1181 = vadd.f32 %v1180, %v1054
  %v1182 = vadd.f32 %v1181, %v1055
  %v1183 = vadd.f32 %v1182, %v1056
  %v1184 = vadd.f32 %v1183, %v1057
  %v1185 = vadd.f32 %v1184, %v1058
  %v1186 = vadd.f32 %v1185, %v1059
  %v1187 = vadd.f32 %v1186, %v1060
  %v1188 = vadd.f32 %v1187, %v1061
  %v1189 = vadd.f32 %v1188, %v1062
  %v1190 = vadd.f32 %v1189, %v1063
  %v1191 = vadd.f32 %v1190, %v1064
  %v1192 = vadd.f32 %v1191, %v1065
  %v1193 = vadd.f32 %v1192, %v1066
  %v1194 = vadd.f32 %v1193, %v1067
  %v1195 = vadd.f32 %v1194, %v1068
  %v1196 = vadd.f32 %v1195, %v1069
  %v1197 = vrot.slane %v1196, 4
  %v1198 = vadd.f32 %v1196, %v1197
  %v1199 = vrot.slane %v1198, 2
  %v1200 = vadd.f32 %v1198, %v1199
  %v1201 = vrot.slane %v1200, 1
  %v1202 = vadd.f32 %v1200, %v1201
  %v1203 = vmul.f32 %v1202, 0.00390625
  %v1204 = vadd.f32 %v1070, %v1071
  %v1205 = vadd.f32 %v1204, %v1072
  %v1206 = vadd.f32 %v1205, %v1073
  %v1207 = vadd.f32 %v1206, %v1074
  %v1208 = vadd.f32 %v1207, %v1075
  %v1209 = vadd.f32 %v1208, %v1076
  %v1210 = vadd.f32 %v1209, %v1077
  %v1211 = vadd.f32 %v1210, %v1078
  %v1212 = vadd.f32 %v1211, %v1079
  %v1213 = vadd.f32 %v1212, %v1080
  %v1214 = vadd.f32 %v1213, %v1081
  %v1215 = vadd.f32 %v1214, %v1082
  %v1216 = vadd.f32 %v1215, %v1083
  %v1217 = vadd.f32 %v1216, %v1084
  %v1218 = vadd.f32 %v1217, %v1085
  %v1219 = vadd.f32 %v1218, %v1086
  %v1220 = vadd.f32 %v1219, %v1087
  %v1221 = vadd.f32 %v1220, %v1088
  %v1222 = vadd.f32 %v1221, %v1089
  %v1223 = vadd.f32 %v1222, %v1090
  %v1224 = vadd.f32 %v1223, %v1091
  %v1225 = vadd.f32 %v1224, %v1092
  %v1226 = vadd.f32 %v1225, %v1093
  %v1227 = vadd.f32 %v1226, %v1094
  %v1228 = vadd.f32 %v1227, %v1095
  %v1229 = vadd.f32 %v1228, %v1096
  %v1230 = vadd.f32 %v1229, %v1097
  %v1231 = vadd.f32 %v1230, %v1098
  %v1232 = vadd.f32 %v1231, %v1099
  %v1233 = vadd.f32 %v1232, %v1100
  %v1234 = vadd.f32 %v1233, %v1101
  %v1235 = vrot.slane %v1234, 4
  %v1236 = vadd.f32 %v1234, %v1235
  %v1237 = vrot.slane %v1236, 2
  %v1238 = vadd.f32 %v1236, %v1237
  %v1239 = vrot.slane %v1238, 1
  %v1240 = vadd.f32 %v1238, %v1239
  %v1241 = vmul.f32 %v1240, 0.00390625
  %v1242 = vadd.f32 %v1102, %v1103
  %v1243 = vadd.f32 %v1242, %v1104
  %v1244 = vadd.f32 %v1243, %v1105
  %v1245 = vadd.f32 %v1244, %v1106
  %v1246 = vadd.f32 %v1245, %v1107
  %v1247 = vadd.f32 %v1246, %v1108
  %v1248 = vadd.f32 %v1247, %v1109
  %v1249 = vadd.f32 %v1248, %v1110
  %v1250 = vadd.f32 %v1249, %v1111
  %v1251 = vadd.f32 %v1250, %v1112
  %v1252 = vadd.f32 %v1251, %v1113
  %v1253 = vadd.f32 %v1252, %v1114
  %v1254 = vadd.f32 %v1253, %v1115
  %v1255 = vadd.f32 %v1254, %v1116
  %v1256 = vadd.f32 %v1255, %v1117
  %v1257 = vadd.f32 %v1256, %v1118
  %v1258 = vadd.f32 %v1257, %v1119
  %v1259 = vadd.f32 %v1258, %v1120
  %v1260 = vadd.f32 %v1259, %v1121
  %v1261 = vadd.f32 %v1260, %v1122
  %v1262 = vadd.f32 %v1261, %v1123
  %v1263 = vadd.f32 %v1262, %v1124
  %v1264 = vadd.f32 %v1263, %v1125
  %v1265 = vadd.f32 %v1264, %v1126
  %v1266 = vadd.f32 %v1265, %v1127
  %v1267 = vadd.f32 %v1266, %v1128
  %v1268 = vadd.f32 %v1267, %v1129
  %v1269 = vadd.f32 %v1268, %v1130
  %v1270 = vadd.f32 %v1269, %v1131
  %v1271 = vadd.f32 %v1270, %v1132
  %v1272 = vadd.f32 %v1271, %v1133
  %v1273 = vrot.slane %v1272, 4
  %v1274 = vadd.f32 %v1272, %v1273
  %v1275 = vrot.slane %v1274, 2
  %v1276 = vadd.f32 %v1274, %v1275
  %v1277 = vrot.slane %v1276, 1
  %v1278 = vadd.f32 %v1276, %v1277
  %v1279 = vmul.f32 %v1278, 0.00390625
  %v1280 = vadd.f32 %v1134, %v1135
  %v1281 = vadd.f32 %v1280, %v1136
  %v1282 = vadd.f32 %v1281, %v1137
  %v1283 = vadd.f32 %v1282, %v1138
  %v1284 = vadd.f32 %v1283, %v1139
  %v1285 = vadd.f32 %v1284, %v1140
  %v1286 = vadd.f32 %v1285, %v1141
  %v1287 = vadd.f32 %v1286, %v1142
  %v1288 = vadd.f32 %v1287, %v1143
  %v1289 = vadd.f32 %v1288, %v1144
  %v1290 = vadd.f32 %v1289, %v1145
  %v1291 = vadd.f32 %v1290, %v1146
  %v1292 = vadd.f32 %v1291, %v1147
  %v1293 = vadd.f32 %v1292, %v1148
  %v1294 = vadd.f32 %v1293, %v1149
  %v1295 = vadd.f32 %v1294, %v1150
  %v1296 = vadd.f32 %v1295, %v1151
  %v1297 = vadd.f32 %v1296, %v1152
  %v1298 = vadd.f32 %v1297, %v1153
  %v1299 = vadd.f32 %v1298, %v1154
  %v1300 = vadd.f32 %v1299, %v1155
  %v1301 = vadd.f32 %v1300, %v1156
  %v1302 = vadd.f32 %v1301, %v1157
  %v1303 = vadd.f32 %v1302, %v1158
  %v1304 = vadd.f32 %v1303, %v1159
  %v1305 = vadd.f32 %v1304, %v1160
  %v1306 = vadd.f32 %v1305, %v1161
  %v1307 = vadd.f32 %v1306, %v1162
  %v1308 = vadd.f32 %v1307, %v1163
  %v1309 = vadd.f32 %v1308, %v1164
  %v1310 = vadd.f32 %v1309, %v1165
  %v1311 = vrot.slane %v1310, 4
  %v1312 = vadd.f32 %v1310, %v1311
  %v1313 = vrot.slane %v1312, 2
  %v1314 = vadd.f32 %v1312, %v1313
  %v1315 = vrot.slane %v1314, 1
  %v1316 = vadd.f32 %v1314, %v1315
  %v1317 = vmul.f32 %v1316, 0.00390625
  %vm1318 = vcmask 1040384
  %v1319 = vsel %vm1318, %v1203, %v1241
  %vm1320 = vcmask 1041408
  %v1321 = vsel %vm1320, %v1319, %v1279
  %vm1322 = vcmask 1042432
  %v1323 = vsel %vm1322, %v1321, %v1317
  %v1324 = vld [vmem:[%s3] sm:$0xff]
  %v1325 = vld [vmem:[%s3 + $0x8] sm:$0xff]
  %v1326 = vld [vmem:[%s3 + $0x10] sm:$0xff]
  %v1327 = vld [vmem:[%s3 + $0x18] sm:$0xff]
  %v1328 = vld [vmem:[%s3 + $0x20] sm:$0xff]
  %v1329 = vld [vmem:[%s3 + $0x28] sm:$0xff]
  %v1330 = vld [vmem:[%s3 + $0x30] sm:$0xff]
  %v1331 = vld [vmem:[%s3 + $0x38] sm:$0xff]
  %v1332 = vld [vmem:[%s3 + $0x40] sm:$0xff]
  %v1333 = vld [vmem:[%s3 + $0x48] sm:$0xff]
  %v1334 = vld [vmem:[%s3 + $0x50] sm:$0xff]
  %v1335 = vld [vmem:[%s3 + $0x58] sm:$0xff]
  %v1336 = vld [vmem:[%s3 + $0x60] sm:$0xff]
  %v1337 = vld [vmem:[%s3 + $0x68] sm:$0xff]
  %v1338 = vld [vmem:[%s3 + $0x70] sm:$0xff]
  %v1339 = vld [vmem:[%s3 + $0x78] sm:$0xff]
  %v1340 = vld [vmem:[%s4] sm:$0x1]
  %v1342 = vperm.slane %v1340, 0
  %1344 = vmatpush.msra.mxu0 %v1339
  %1345 = vmatpush.msra.mxu0 %v1338
  %1346 = vmatpush.msra.mxu0 %v1337
  %1347 = vmatpush.msra.mxu0 %v1336
  %1348 = vmatpush.msra.mxu0 %v1335
  %1349 = vmatpush.msra.mxu0 %v1334
  %1350 = vmatpush.msra.mxu0 %v1333
  %1351 = vmatpush.msra.mxu0 %v1332
  %1352 = vmatpush.msra.mxu0 %v1331
  %1353 = vmatpush.msra.mxu0 %v1330
  %1354 = vmatpush.msra.mxu0 %v1329
  %1355 = vmatpush.msra.mxu0 %v1328
  %1356 = vmatpush.msra.mxu0 %v1327
  %1357 = vmatpush.msra.mxu0 %v1326
  %1358 = vmatpush.msra.mxu0 %v1325
  %1359 = vmatpush.msra.mxu0 %v1324
  %1360 = vmatmul.f32.gmra.mxu0 %v1323
  %v1361 = vpop.f32.mrf.mxu0
  %v1362 = vadd.f32 %v1342, %v1361
  %1363 = vdwg.mxu0
  %v1364 = vld [vmem:[%s5] sm:$0x3]
  %v1365 = vld [vmem:[%s9] sm:$0xff]
  %v1366 = vld [vmem:[%s9 + $0x8] sm:$0xff]
  %v1367 = vld [vmem:[%s9 + $0x10] sm:$0xff]
  %v1368 = vld [vmem:[%s9 + $0x18] sm:$0xff]
  %v1369 = vld [vmem:[%s11] sm:$0x1]
  %v1371 = vperm.slane %v1369, 0
  %v1374 = vsel %vm516, %v1364, 0
  %1376 = vmatpush.msra.mxu0 0.0
  %1377 = vmatpush.msra.mxu0 0.0
  %1378 = vmatpush.msra.mxu0 0.0
  %1379 = vmatpush.msra.mxu0 0.0
  %1380 = vmatpush.msra.mxu0 0.0
  %1381 = vmatpush.msra.mxu0 0.0
  %1382 = vmatpush.msra.mxu0 0.0
  %1383 = vmatpush.msra.mxu0 0.0
  %1384 = vmatpush.msra.mxu0 0.0
  %1385 = vmatpush.msra.mxu0 0.0
  %1386 = vmatpush.msra.mxu0 0.0
  %1387 = vmatpush.msra.mxu0 0.0
  %1388 = vmatpush.msra.mxu0 %v1368
  %1389 = vmatpush.msra.mxu0 %v1367
  %1390 = vmatpush.msra.mxu0 %v1366
  %1391 = vmatpush.msra.mxu0 %v1365
  %1392 = vmatmul.f32.gmra.mxu0 %v1374
  %v1393 = vpop.f32.mrf.mxu0
  %v1394 = vadd.f32 %v1371, %v1393
  %1395 = vdwg.mxu0
  %v1396 = vld [vmem:[%s8] sm:$0xff]
  %v1397 = vld [vmem:[%s8 + $0x8] sm:$0xff]
  %v1398 = vld [vmem:[%s8 + $0x10] sm:$0xff]
  %v1399 = vld [vmem:[%s8 + $0x18] sm:$0xff]
  %v1400 = vld [vmem:[%s8 + $0x20] sm:$0xff]
  %v1401 = vld [vmem:[%s8 + $0x28] sm:$0xff]
  %v1402 = vld [vmem:[%s8 + $0x30] sm:$0xff]
  %v1403 = vld [vmem:[%s8 + $0x38] sm:$0xff]
  %v1404 = vld [vmem:[%s8 + $0x40] sm:$0xff]
  %v1405 = vld [vmem:[%s8 + $0x48] sm:$0xff]
  %v1406 = vld [vmem:[%s8 + $0x50] sm:$0xff]
  %v1407 = vld [vmem:[%s8 + $0x58] sm:$0xff]
  %v1408 = vld [vmem:[%s8 + $0x60] sm:$0xff]
  %v1409 = vld [vmem:[%s8 + $0x68] sm:$0xff]
  %v1410 = vld [vmem:[%s8 + $0x70] sm:$0xff]
  %v1411 = vld [vmem:[%s8 + $0x78] sm:$0xff]
  %1412 = vmatpush.msra.mxu0 %v1411
  %1413 = vmatpush.msra.mxu0 %v1410
  %1414 = vmatpush.msra.mxu0 %v1409
  %1415 = vmatpush.msra.mxu0 %v1408
  %1416 = vmatpush.msra.mxu0 %v1407
  %1417 = vmatpush.msra.mxu0 %v1406
  %1418 = vmatpush.msra.mxu0 %v1405
  %1419 = vmatpush.msra.mxu0 %v1404
  %1420 = vmatpush.msra.mxu0 %v1403
  %1421 = vmatpush.msra.mxu0 %v1402
  %1422 = vmatpush.msra.mxu0 %v1401
  %1423 = vmatpush.msra.mxu0 %v1400
  %1424 = vmatpush.msra.mxu0 %v1399
  %1425 = vmatpush.msra.mxu0 %v1398
  %1426 = vmatpush.msra.mxu0 %v1397
  %1427 = vmatpush.msra.mxu0 %v1396
  %1428 = vmatmul.f32.gmra.mxu0 %v1362
  %v1429 = vpop.f32.mrf.mxu0
  %v1430 = vadd.f32 0.0, %v1429
  %1431 = vdwg.mxu0
  %v1432 = vadd.f32 %v1394, %v1430
  %s1433 = scalar_lea.vmem %s8, 128
  %v1434 = vld [vmem:[%s1433] sm:$0xff]
  %v1435 = vld [vmem:[%s1433 + $0x8] sm:$0xff]
  %v1436 = vld [vmem:[%s1433 + $0x10] sm:$0xff]
  %v1437 = vld [vmem:[%s1433 + $0x18] sm:$0xff]
  %v1438 = vld [vmem:[%s1433 + $0x20] sm:$0xff]
  %v1439 = vld [vmem:[%s1433 + $0x28] sm:$0xff]
  %v1440 = vld [vmem:[%s1433 + $0x30] sm:$0xff]
  %v1441 = vld [vmem:[%s1433 + $0x38] sm:$0xff]
  %v1442 = vld [vmem:[%s1433 + $0x40] sm:$0xff]
  %v1443 = vld [vmem:[%s1433 + $0x48] sm:$0xff]
  %v1444 = vld [vmem:[%s1433 + $0x50] sm:$0xff]
  %v1445 = vld [vmem:[%s1433 + $0x58] sm:$0xff]
  %v1446 = vld [vmem:[%s1433 + $0x60] sm:$0xff]
  %v1447 = vld [vmem:[%s1433 + $0x68] sm:$0xff]
  %v1448 = vld [vmem:[%s1433 + $0x70] sm:$0xff]
  %v1449 = vld [vmem:[%s1433 + $0x78] sm:$0xff]
  %v1451 = vrot.slane %v1362, 2
  %1453 = vmatpush.msra.mxu0 %v1449
  %1454 = vmatpush.msra.mxu0 %v1448
  %1455 = vmatpush.msra.mxu0 %v1447
  %1456 = vmatpush.msra.mxu0 %v1446
  %1457 = vmatpush.msra.mxu0 %v1445
  %1458 = vmatpush.msra.mxu0 %v1444
  %1459 = vmatpush.msra.mxu0 %v1443
  %1460 = vmatpush.msra.mxu0 %v1442
  %1461 = vmatpush.msra.mxu0 %v1441
  %1462 = vmatpush.msra.mxu0 %v1440
  %1463 = vmatpush.msra.mxu0 %v1439
  %1464 = vmatpush.msra.mxu0 %v1438
  %1465 = vmatpush.msra.mxu0 %v1437
  %1466 = vmatpush.msra.mxu0 %v1436
  %1467 = vmatpush.msra.mxu0 %v1435
  %1468 = vmatpush.msra.mxu0 %v1434
  %1469 = vmatmul.f32.gmra.mxu0 %v1451
  %v1470 = vpop.f32.mrf.mxu0
  %v1471 = vadd.f32 0.0, %v1470
  %1472 = vdwg.mxu0
  %v1473 = vadd.f32 %v1432, %v1471
  %v1474 = vld [vmem:[%s7] sm:$0xff]
  %v1475 = vld [vmem:[%s7 + $0x8] sm:$0xff]
  %v1476 = vld [vmem:[%s7 + $0x10] sm:$0xff]
  %v1477 = vld [vmem:[%s7 + $0x18] sm:$0xff]
  %v1478 = vld [vmem:[%s7 + $0x20] sm:$0xff]
  %v1479 = vld [vmem:[%s7 + $0x28] sm:$0xff]
  %v1480 = vld [vmem:[%s7 + $0x30] sm:$0xff]
  %v1481 = vld [vmem:[%s7 + $0x38] sm:$0xff]
  %v1482 = vld [vmem:[%s7 + $0x40] sm:$0xff]
  %v1483 = vld [vmem:[%s7 + $0x48] sm:$0xff]
  %v1484 = vld [vmem:[%s7 + $0x50] sm:$0xff]
  %v1485 = vld [vmem:[%s7 + $0x58] sm:$0xff]
  %v1486 = vld [vmem:[%s7 + $0x60] sm:$0xff]
  %v1487 = vld [vmem:[%s7 + $0x68] sm:$0xff]
  %v1488 = vld [vmem:[%s7 + $0x70] sm:$0xff]
  %v1489 = vld [vmem:[%s7 + $0x78] sm:$0xff]
  %v1490 = vld [vmem:[%s10] sm:$0x1]
  %v1491 = vld [vmem:[%s12] sm:$0xff]
  %v1492 = vld [vmem:[%s12 + $0x8] sm:$0xff]
  %v1493 = vld [vmem:[%s12 + $0x10] sm:$0xff]
  %v1494 = vld [vmem:[%s12 + $0x18] sm:$0xff]
  %v1495 = vld [vmem:[%s12 + $0x20] sm:$0xff]
  %v1496 = vld [vmem:[%s12 + $0x28] sm:$0xff]
  %v1497 = vld [vmem:[%s12 + $0x30] sm:$0xff]
  %v1498 = vld [vmem:[%s12 + $0x38] sm:$0xff]
  %v1499 = vld [vmem:[%s12 + $0x40] sm:$0xff]
  %v1500 = vld [vmem:[%s12 + $0x48] sm:$0xff]
  %v1501 = vld [vmem:[%s12 + $0x50] sm:$0xff]
  %v1502 = vld [vmem:[%s12 + $0x58] sm:$0xff]
  %v1503 = vld [vmem:[%s12 + $0x60] sm:$0xff]
  %v1504 = vld [vmem:[%s12 + $0x68] sm:$0xff]
  %v1505 = vld [vmem:[%s12 + $0x70] sm:$0xff]
  %v1506 = vld [vmem:[%s12 + $0x78] sm:$0xff]
  %v1507 = vld [vmem:[%s13] sm:$0x1]
  %v1508 = vld [vmem:[%s6] sm:$0x3]
  %v1509 = vmul.f32 %v1508, 0.012499756
  %1510 = vmatpush.msra.mxu0 %v1489
  %1511 = vmatpush.msra.mxu0 %v1488
  %1512 = vmatpush.msra.mxu0 %v1487
  %1513 = vmatpush.msra.mxu0 %v1486
  %1514 = vmatpush.msra.mxu0 %v1485
  %1515 = vmatpush.msra.mxu0 %v1484
  %1516 = vmatpush.msra.mxu0 %v1483
  %1517 = vmatpush.msra.mxu0 %v1482
  %1518 = vmatpush.msra.mxu0 %v1481
  %1519 = vmatpush.msra.mxu0 %v1480
  %1520 = vmatpush.msra.mxu0 %v1479
  %1521 = vmatpush.msra.mxu0 %v1478
  %1522 = vmatpush.msra.mxu0 %v1477
  %1523 = vmatpush.msra.mxu0 %v1476
  %1524 = vmatpush.msra.mxu0 %v1475
  %1525 = vmatpush.msra.mxu0 %v1474
  %1526 = vmatmul.f32.gmra.mxu0 %v1509
  %v1527 = vpop.f32.mrf.mxu0
  %v1528 = vadd.f32 %v1473, %v1527
  %1529 = vdwg.mxu0
  %v1530 = vmul.f32 %v1490, 1.0955067
  %v1532 = vperm.slane %v1530, 0
  %v1534 = vadd.f32 %v1528, %v1532
  %v1535 = vmax.f32 %v1534, 0.0
  %v1537 = vperm.slane %v1507, 0
  %1539 = vmatpush.msra.mxu0 %v1506
  %1540 = vmatpush.msra.mxu0 %v1505
  %1541 = vmatpush.msra.mxu0 %v1504
  %1542 = vmatpush.msra.mxu0 %v1503
  %1543 = vmatpush.msra.mxu0 %v1502
  %1544 = vmatpush.msra.mxu0 %v1501
  %1545 = vmatpush.msra.mxu0 %v1500
  %1546 = vmatpush.msra.mxu0 %v1499
  %1547 = vmatpush.msra.mxu0 %v1498
  %1548 = vmatpush.msra.mxu0 %v1497
  %1549 = vmatpush.msra.mxu0 %v1496
  %1550 = vmatpush.msra.mxu0 %v1495
  %1551 = vmatpush.msra.mxu0 %v1494
  %1552 = vmatpush.msra.mxu0 %v1493
  %1553 = vmatpush.msra.mxu0 %v1492
  %1554 = vmatpush.msra.mxu0 %v1491
  %1555 = vmatmul.f32.gmra.mxu0 %v1535
  %v1556 = vpop.f32.mrf.mxu0
  %v1557 = vadd.f32 %v1537, %v1556
  %1558 = vdwg.mxu0
  %v1559 = vmul.f32 %v1508, 3.9060975e-05
  %v1560 = vmul.f32 %v1557, 0.49999022
  %v1561 = vadd.f32 %v1559, %v1560
  %v1562 = vmul.f32 %v1508, 0.2852412
  %v1563 = vmul.f32 %v1561, 0.7147588
  %v1564 = vadd.f32 %v1562, %v1563
  %v1565 = vmul.f32 %v1564, 0.043812048
  %1566 = vmatpush.msra.mxu0 %v1489
  %1567 = vmatpush.msra.mxu0 %v1488
  %1568 = vmatpush.msra.mxu0 %v1487
  %1569 = vmatpush.msra.mxu0 %v1486
  %1570 = vmatpush.msra.mxu0 %v1485
  %1571 = vmatpush.msra.mxu0 %v1484
  %1572 = vmatpush.msra.mxu0 %v1483
  %1573 = vmatpush.msra.mxu0 %v1482
  %1574 = vmatpush.msra.mxu0 %v1481
  %1575 = vmatpush.msra.mxu0 %v1480
  %1576 = vmatpush.msra.mxu0 %v1479
  %1577 = vmatpush.msra.mxu0 %v1478
  %1578 = vmatpush.msra.mxu0 %v1477
  %1579 = vmatpush.msra.mxu0 %v1476
  %1580 = vmatpush.msra.mxu0 %v1475
  %1581 = vmatpush.msra.mxu0 %v1474
  %1582 = vmatmul.f32.gmra.mxu0 %v1565
  %v1583 = vpop.f32.mrf.mxu0
  %v1584 = vadd.f32 %v1473, %v1583
  %1585 = vdwg.mxu0
  %v1586 = vmul.f32 %v1490, 0.7819016
  %v1588 = vperm.slane %v1586, 0
  %v1590 = vadd.f32 %v1584, %v1588
  %v1591 = vmax.f32 %v1590, 0.0
  %1592 = vmatpush.msra.mxu0 %v1506
  %1593 = vmatpush.msra.mxu0 %v1505
  %1594 = vmatpush.msra.mxu0 %v1504
  %1595 = vmatpush.msra.mxu0 %v1503
  %1596 = vmatpush.msra.mxu0 %v1502
  %1597 = vmatpush.msra.mxu0 %v1501
  %1598 = vmatpush.msra.mxu0 %v1500
  %1599 = vmatpush.msra.mxu0 %v1499
  %1600 = vmatpush.msra.mxu0 %v1498
  %1601 = vmatpush.msra.mxu0 %v1497
  %1602 = vmatpush.msra.mxu0 %v1496
  %1603 = vmatpush.msra.mxu0 %v1495
  %1604 = vmatpush.msra.mxu0 %v1494
  %1605 = vmatpush.msra.mxu0 %v1493
  %1606 = vmatpush.msra.mxu0 %v1492
  %1607 = vmatpush.msra.mxu0 %v1491
  %1608 = vmatmul.f32.gmra.mxu0 %v1591
  %v1609 = vpop.f32.mrf.mxu0
  %v1610 = vadd.f32 %v1537, %v1609
  %1611 = vdwg.mxu0
  %v1612 = vmul.f32 %v1564, 0.0004798739
  %v1613 = vmul.f32 %v1610, 0.49988002
  %v1614 = vadd.f32 %v1612, %v1613
  %v1615 = vmul.f32 %v1564, 0.2852412
  %v1616 = vmul.f32 %v1614, 0.7147588
  %v1617 = vadd.f32 %v1615, %v1616
  %v1618 = vmul.f32 %v1617, 0.15318209
  %1619 = vmatpush.msra.mxu0 %v1489
  %1620 = vmatpush.msra.mxu0 %v1488
  %1621 = vmatpush.msra.mxu0 %v1487
  %1622 = vmatpush.msra.mxu0 %v1486
  %1623 = vmatpush.msra.mxu0 %v1485
  %1624 = vmatpush.msra.mxu0 %v1484
  %1625 = vmatpush.msra.mxu0 %v1483
  %1626 = vmatpush.msra.mxu0 %v1482
  %1627 = vmatpush.msra.mxu0 %v1481
  %1628 = vmatpush.msra.mxu0 %v1480
  %1629 = vmatpush.msra.mxu0 %v1479
  %1630 = vmatpush.msra.mxu0 %v1478
  %1631 = vmatpush.msra.mxu0 %v1477
  %1632 = vmatpush.msra.mxu0 %v1476
  %1633 = vmatpush.msra.mxu0 %v1475
  %1634 = vmatpush.msra.mxu0 %v1474
  %1635 = vmatmul.f32.gmra.mxu0 %v1618
  %v1636 = vpop.f32.mrf.mxu0
  %v1637 = vadd.f32 %v1473, %v1636
  %1638 = vdwg.mxu0
  %v1639 = vmul.f32 %v1490, 0.46829656
  %v1641 = vperm.slane %v1639, 0
  %v1643 = vadd.f32 %v1637, %v1641
  %v1644 = vmax.f32 %v1643, 0.0
  %1645 = vmatpush.msra.mxu0 %v1506
  %1646 = vmatpush.msra.mxu0 %v1505
  %1647 = vmatpush.msra.mxu0 %v1504
  %1648 = vmatpush.msra.mxu0 %v1503
  %1649 = vmatpush.msra.mxu0 %v1502
  %1650 = vmatpush.msra.mxu0 %v1501
  %1651 = vmatpush.msra.mxu0 %v1500
  %1652 = vmatpush.msra.mxu0 %v1499
  %1653 = vmatpush.msra.mxu0 %v1498
  %1654 = vmatpush.msra.mxu0 %v1497
  %1655 = vmatpush.msra.mxu0 %v1496
  %1656 = vmatpush.msra.mxu0 %v1495
  %1657 = vmatpush.msra.mxu0 %v1494
  %1658 = vmatpush.msra.mxu0 %v1493
  %1659 = vmatpush.msra.mxu0 %v1492
  %1660 = vmatpush.msra.mxu0 %v1491
  %1661 = vmatmul.f32.gmra.mxu0 %v1644
  %v1662 = vpop.f32.mrf.mxu0
  %v1663 = vadd.f32 %v1537, %v1662
  %1664 = vdwg.mxu0
  %v1665 = vmul.f32 %v1617, 0.005866188
  %v1666 = vmul.f32 %v1663, 0.49853128
  %v1667 = vadd.f32 %v1665, %v1666
  %v1668 = vmul.f32 %v1617, 0.2852412
  %v1669 = vmul.f32 %v1667, 0.7147588
  %v1670 = vadd.f32 %v1668, %v1669
  %v1671 = vmul.f32 %v1670, 0.52007943
  %1672 = vmatpush.msra.mxu0 %v1489
  %1673 = vmatpush.msra.mxu0 %v1488
  %1674 = vmatpush.msra.mxu0 %v1487
  %1675 = vmatpush.msra.mxu0 %v1486
  %1676 = vmatpush.msra.mxu0 %v1485
  %1677 = vmatpush.msra.mxu0 %v1484
  %1678 = vmatpush.msra.mxu0 %v1483
  %1679 = vmatpush.msra.mxu0 %v1482
  %1680 = vmatpush.msra.mxu0 %v1481
  %1681 = vmatpush.msra.mxu0 %v1480
  %1682 = vmatpush.msra.mxu0 %v1479
  %1683 = vmatpush.msra.mxu0 %v1478
  %1684 = vmatpush.msra.mxu0 %v1477
  %1685 = vmatpush.msra.mxu0 %v1476
  %1686 = vmatpush.msra.mxu0 %v1475
  %1687 = vmatpush.msra.mxu0 %v1474
  %1688 = vmatmul.f32.gmra.mxu0 %v1671
  %v1689 = vpop.f32.mrf.mxu0
  %v1690 = vadd.f32 %v1473, %v1689
  %1691 = vdwg.mxu0
  %v1692 = vmul.f32 %v1490, 0.1546915
  %v1694 = vperm.slane %v1692, 0
  %v1696 = vadd.f32 %v1690, %v1694
  %v1697 = vmax.f32 %v1696, 0.0
  %1698 = vmatpush.msra.mxu0 %v1506
  %1699 = vmatpush.msra.mxu0 %v1505
  %1700 = vmatpush.msra.mxu0 %v1504
  %1701 = vmatpush.msra.mxu0 %v1503
  %1702 = vmatpush.msra.mxu0 %v1502
  %1703 = vmatpush.msra.mxu0 %v1501
  %1704 = vmatpush.msra.mxu0 %v1500
  %1705 = vmatpush.msra.mxu0 %v1499
  %1706 = vmatpush.msra.mxu0 %v1498
  %1707 = vmatpush.msra.mxu0 %v1497
  %1708 = vmatpush.msra.mxu0 %v1496
  %1709 = vmatpush.msra.mxu0 %v1495
  %1710 = vmatpush.msra.mxu0 %v1494
  %1711 = vmatpush.msra.mxu0 %v1493
  %1712 = vmatpush.msra.mxu0 %v1492
  %1713 = vmatpush.msra.mxu0 %v1491
  %1714 = vmatmul.f32.gmra.mxu0 %v1697
  %v1715 = vpop.f32.mrf.mxu0
  %v1716 = vadd.f32 %v1537, %v1715
  %1717 = vdwg.mxu0
  %v1718 = vmul.f32 %v1670, 0.06762065
  %v1719 = vmul.f32 %v1716, 0.48279896
  %v1720 = vadd.f32 %v1718, %v1719
  %v1721 = vmul.f32 %v1670, 0.2852412
  %v1722 = vmul.f32 %v1720, 0.7147588
  %v1723 = vadd.f32 %v1721, %v1722
  %v1724 = vmul.f32 %v1723, 1.3730042
  %1725 = vmatpush.msra.mxu0 %v1489
  %1726 = vmatpush.msra.mxu0 %v1488
  %1727 = vmatpush.msra.mxu0 %v1487
  %1728 = vmatpush.msra.mxu0 %v1486
  %1729 = vmatpush.msra.mxu0 %v1485
  %1730 = vmatpush.msra.mxu0 %v1484
  %1731 = vmatpush.msra.mxu0 %v1483
  %1732 = vmatpush.msra.mxu0 %v1482
  %1733 = vmatpush.msra.mxu0 %v1481
  %1734 = vmatpush.msra.mxu0 %v1480
  %1735 = vmatpush.msra.mxu0 %v1479
  %1736 = vmatpush.msra.mxu0 %v1478
  %1737 = vmatpush.msra.mxu0 %v1477
  %1738 = vmatpush.msra.mxu0 %v1476
  %1739 = vmatpush.msra.mxu0 %v1475
  %1740 = vmatpush.msra.mxu0 %v1474
  %1741 = vmatmul.f32.gmra.mxu0 %v1724
  %v1742 = vpop.f32.mrf.mxu0
  %v1743 = vadd.f32 %v1473, %v1742
  %1744 = vdwg.mxu0
  %v1745 = vmul.f32 %v1490, -0.15891355
  %v1747 = vperm.slane %v1745, 0
  %v1749 = vadd.f32 %v1743, %v1747
  %v1750 = vmax.f32 %v1749, 0.0
  %1751 = vmatpush.msra.mxu0 %v1506
  %1752 = vmatpush.msra.mxu0 %v1505
  %1753 = vmatpush.msra.mxu0 %v1504
  %1754 = vmatpush.msra.mxu0 %v1503
  %1755 = vmatpush.msra.mxu0 %v1502
  %1756 = vmatpush.msra.mxu0 %v1501
  %1757 = vmatpush.msra.mxu0 %v1500
  %1758 = vmatpush.msra.mxu0 %v1499
  %1759 = vmatpush.msra.mxu0 %v1498
  %1760 = vmatpush.msra.mxu0 %v1497
  %1761 = vmatpush.msra.mxu0 %v1496
  %1762 = vmatpush.msra.mxu0 %v1495
  %1763 = vmatpush.msra.mxu0 %v1494
  %1764 = vmatpush.msra.mxu0 %v1493
  %1765 = vmatpush.msra.mxu0 %v1492
  %1766 = vmatpush.msra.mxu0 %v1491
  %1767 = vmatmul.f32.gmra.mxu0 %v1750
  %v1768 = vpop.f32.mrf.mxu0
  %v1769 = vadd.f32 %v1537, %v1768
  %1770 = vdwg.mxu0
  %v1771 = vmul.f32 %v1723, 0.47128513
  %v1772 = vmul.f32 %v1769, 0.3635639
  %v1773 = vadd.f32 %v1771, %v1772
  %v1774 = vmul.f32 %v1723, 0.2852412
  %v1775 = vmul.f32 %v1773, 0.7147588
  %v1776 = vadd.f32 %v1774, %v1775
  %v1777 = vmul.f32 %v1776, 1.9145312
  %1778 = vmatpush.msra.mxu0 %v1489
  %1779 = vmatpush.msra.mxu0 %v1488
  %1780 = vmatpush.msra.mxu0 %v1487
  %1781 = vmatpush.msra.mxu0 %v1486
  %1782 = vmatpush.msra.mxu0 %v1485
  %1783 = vmatpush.msra.mxu0 %v1484
  %1784 = vmatpush.msra.mxu0 %v1483
  %1785 = vmatpush.msra.mxu0 %v1482
  %1786 = vmatpush.msra.mxu0 %v1481
  %1787 = vmatpush.msra.mxu0 %v1480
  %1788 = vmatpush.msra.mxu0 %v1479
  %1789 = vmatpush.msra.mxu0 %v1478
  %1790 = vmatpush.msra.mxu0 %v1477
  %1791 = vmatpush.msra.mxu0 %v1476
  %1792 = vmatpush.msra.mxu0 %v1475
  %1793 = vmatpush.msra.mxu0 %v1474
  %1794 = vmatmul.f32.gmra.mxu0 %v1777
  %v1795 = vpop.f32.mrf.mxu0
  %v1796 = vadd.f32 %v1473, %v1795
  %1797 = vdwg.mxu0
  %v1798 = vmul.f32 %v1490, -0.4725186
  %v1800 = vperm.slane %v1798, 0
  %v1802 = vadd.f32 %v1796, %v1800
  %v1803 = vmax.f32 %v1802, 0.0
  %1804 = vmatpush.msra.mxu0 %v1506
  %1805 = vmatpush.msra.mxu0 %v1505
  %1806 = vmatpush.msra.mxu0 %v1504
  %1807 = vmatpush.msra.mxu0 %v1503
  %1808 = vmatpush.msra.mxu0 %v1502
  %1809 = vmatpush.msra.mxu0 %v1501
  %1810 = vmatpush.msra.mxu0 %v1500
  %1811 = vmatpush.msra.mxu0 %v1499
  %1812 = vmatpush.msra.mxu0 %v1498
  %1813 = vmatpush.msra.mxu0 %v1497
  %1814 = vmatpush.msra.mxu0 %v1496
  %1815 = vmatpush.msra.mxu0 %v1495
  %1816 = vmatpush.msra.mxu0 %v1494
  %1817 = vmatpush.msra.mxu0 %v1493
  %1818 = vmatpush.msra.mxu0 %v1492
  %1819 = vmatpush.msra.mxu0 %v1491
  %1820 = vmatmul.f32.gmra.mxu0 %v1803
  %v1821 = vpop.f32.mrf.mxu0
  %v1822 = vadd.f32 %v1537, %v1821
  %1823 = vdwg.mxu0
  %v1824 = vmul.f32 %v1776, 0.91635746
  %v1825 = vmul.f32 %v1822, 0.14460509
  %v1826 = vadd.f32 %v1824, %v1825
  %v1827 = vmul.f32 %v1776, 0.2852412
  %v1828 = vmul.f32 %v1826, 0.7147588
  %v1829 = vadd.f32 %v1827, %v1828
  %v1830 = vmul.f32 %v1829, 1.9926146
  %1831 = vmatpush.msra.mxu0 %v1489
  %1832 = vmatpush.msra.mxu0 %v1488
  %1833 = vmatpush.msra.mxu0 %v1487
  %1834 = vmatpush.msra.mxu0 %v1486
  %1835 = vmatpush.msra.mxu0 %v1485
  %1836 = vmatpush.msra.mxu0 %v1484
  %1837 = vmatpush.msra.mxu0 %v1483
  %1838 = vmatpush.msra.mxu0 %v1482
  %1839 = vmatpush.msra.mxu0 %v1481
  %1840 = vmatpush.msra.mxu0 %v1480
  %1841 = vmatpush.msra.mxu0 %v1479
  %1842 = vmatpush.msra.mxu0 %v1478
  %1843 = vmatpush.msra.mxu0 %v1477
  %1844 = vmatpush.msra.mxu0 %v1476
  %1845 = vmatpush.msra.mxu0 %v1475
  %1846 = vmatpush.msra.mxu0 %v1474
  %1847 = vmatmul.f32.gmra.mxu0 %v1830
  %v1848 = vpop.f32.mrf.mxu0
  %v1849 = vadd.f32 %v1473, %v1848
  %1850 = vdwg.mxu0
  %v1851 = vmul.f32 %v1490, -0.78612363
  %v1853 = vperm.slane %v1851, 0
  %v1855 = vadd.f32 %v1849, %v1853
  %v1856 = vmax.f32 %v1855, 0.0
  %1857 = vmatpush.msra.mxu0 %v1506
  %1858 = vmatpush.msra.mxu0 %v1505
  %1859 = vmatpush.msra.mxu0 %v1504
  %1860 = vmatpush.msra.mxu0 %v1503
  %1861 = vmatpush.msra.mxu0 %v1502
  %1862 = vmatpush.msra.mxu0 %v1501
  %1863 = vmatpush.msra.mxu0 %v1500
  %1864 = vmatpush.msra.mxu0 %v1499
  %1865 = vmatpush.msra.mxu0 %v1498
  %1866 = vmatpush.msra.mxu0 %v1497
  %1867 = vmatpush.msra.mxu0 %v1496
  %1868 = vmatpush.msra.mxu0 %v1495
  %1869 = vmatpush.msra.mxu0 %v1494
  %1870 = vmatpush.msra.mxu0 %v1493
  %1871 = vmatpush.msra.mxu0 %v1492
  %1872 = vmatpush.msra.mxu0 %v1491
  %1873 = vmatmul.f32.gmra.mxu0 %v1856
  %v1874 = vpop.f32.mrf.mxu0
  %v1875 = vadd.f32 %v1537, %v1874
  %1876 = vdwg.mxu0
  %v1877 = vmul.f32 %v1829, 0.9926282
  %v1878 = vmul.f32 %v1875, 0.04292958
  %v1879 = vadd.f32 %v1877, %v1878
  %v1880 = vmul.f32 %v1829, 0.2852412
  %v1881 = vmul.f32 %v1879, 0.7147588
  %v1882 = vadd.f32 %v1880, %v1881
  %v1883 = vmul.f32 %v1882, 1.9993961
  %1884 = vmatpush.msra.mxu0 %v1489
  %1885 = vmatpush.msra.mxu0 %v1488
  %1886 = vmatpush.msra.mxu0 %v1487
  %1887 = vmatpush.msra.mxu0 %v1486
  %1888 = vmatpush.msra.mxu0 %v1485
  %1889 = vmatpush.msra.mxu0 %v1484
  %1890 = vmatpush.msra.mxu0 %v1483
  %1891 = vmatpush.msra.mxu0 %v1482
  %1892 = vmatpush.msra.mxu0 %v1481
  %1893 = vmatpush.msra.mxu0 %v1480
  %1894 = vmatpush.msra.mxu0 %v1479
  %1895 = vmatpush.msra.mxu0 %v1478
  %1896 = vmatpush.msra.mxu0 %v1477
  %1897 = vmatpush.msra.mxu0 %v1476
  %1898 = vmatpush.msra.mxu0 %v1475
  %1899 = vmatpush.msra.mxu0 %v1474
  %1900 = vmatmul.f32.gmra.mxu0 %v1883
  %v1901 = vpop.f32.mrf.mxu0
  %v1902 = vadd.f32 %v1473, %v1901
  %1903 = vdwg.mxu0
  %v1904 = vmul.f32 %v1490, -1.0997287
  %v1906 = vperm.slane %v1904, 0
  %v1908 = vadd.f32 %v1902, %v1906
  %v1909 = vmax.f32 %v1908, 0.0
  %1910 = vmatpush.msra.mxu0 %v1506
  %1911 = vmatpush.msra.mxu0 %v1505
  %1912 = vmatpush.msra.mxu0 %v1504
  %1913 = vmatpush.msra.mxu0 %v1503
  %1914 = vmatpush.msra.mxu0 %v1502
  %1915 = vmatpush.msra.mxu0 %v1501
  %1916 = vmatpush.msra.mxu0 %v1500
  %1917 = vmatpush.msra.mxu0 %v1499
  %1918 = vmatpush.msra.mxu0 %v1498
  %1919 = vmatpush.msra.mxu0 %v1497
  %1920 = vmatpush.msra.mxu0 %v1496
  %1921 = vmatpush.msra.mxu0 %v1495
  %1922 = vmatpush.msra.mxu0 %v1494
  %1923 = vmatpush.msra.mxu0 %v1493
  %1924 = vmatpush.msra.mxu0 %v1492
  %1925 = vmatpush.msra.mxu0 %v1491
  %1926 = vmatmul.f32.gmra.mxu0 %v1909
  %v1927 = vpop.f32.mrf.mxu0
  %v1928 = vadd.f32 %v1537, %v1927
  %1929 = vdwg.mxu0
  %v1930 = vmul.f32 %v1882, 0.99939615
  %v1931 = vmul.f32 %v1928, 0.012286958
  %v1932 = vadd.f32 %v1930, %v1931
  %v1933 = vmul.f32 %v1882, 0.2852412
  %v1934 = vmul.f32 %v1932, 0.7147588
  %v1935 = vadd.f32 %v1933, %v1934
  %v1936 = vmul.f32 %v1935, 1.9999509
  %1937 = vmatpush.msra.mxu0 %v1489
  %1938 = vmatpush.msra.mxu0 %v1488
  %1939 = vmatpush.msra.mxu0 %v1487
  %1940 = vmatpush.msra.mxu0 %v1486
  %1941 = vmatpush.msra.mxu0 %v1485
  %1942 = vmatpush.msra.mxu0 %v1484
  %1943 = vmatpush.msra.mxu0 %v1483
  %1944 = vmatpush.msra.mxu0 %v1482
  %1945 = vmatpush.msra.mxu0 %v1481
  %1946 = vmatpush.msra.mxu0 %v1480
  %1947 = vmatpush.msra.mxu0 %v1479
  %1948 = vmatpush.msra.mxu0 %v1478
  %1949 = vmatpush.msra.mxu0 %v1477
  %1950 = vmatpush.msra.mxu0 %v1476
  %1951 = vmatpush.msra.mxu0 %v1475
  %1952 = vmatpush.msra.mxu0 %v1474
  %1953 = vmatmul.f32.gmra.mxu0 %v1936
  %v1954 = vpop.f32.mrf.mxu0
  %v1955 = vadd.f32 %v1473, %v1954
  %1956 = vdwg.mxu0
  %v1957 = vmul.f32 %v1490, -1.4133338
  %v1959 = vperm.slane %v1957, 0
  %v1961 = vadd.f32 %v1955, %v1959
  %v1962 = vmax.f32 %v1961, 0.0
  %1963 = vmatpush.msra.mxu0 %v1506
  %1964 = vmatpush.msra.mxu0 %v1505
  %1965 = vmatpush.msra.mxu0 %v1504
  %1966 = vmatpush.msra.mxu0 %v1503
  %1967 = vmatpush.msra.mxu0 %v1502
  %1968 = vmatpush.msra.mxu0 %v1501
  %1969 = vmatpush.msra.mxu0 %v1500
  %1970 = vmatpush.msra.mxu0 %v1499
  %1971 = vmatpush.msra.mxu0 %v1498
  %1972 = vmatpush.msra.mxu0 %v1497
  %1973 = vmatpush.msra.mxu0 %v1496
  %1974 = vmatpush.msra.mxu0 %v1495
  %1975 = vmatpush.msra.mxu0 %v1494
  %1976 = vmatpush.msra.mxu0 %v1493
  %1977 = vmatpush.msra.mxu0 %v1492
  %1978 = vmatpush.msra.mxu0 %v1491
  %1979 = vmatmul.f32.gmra.mxu0 %v1962
  %v1980 = vpop.f32.mrf.mxu0
  %v1981 = vadd.f32 %v1537, %v1980
  %1982 = vdwg.mxu0
  %v1983 = vmul.f32 %v1935, 0.9999508
  %v1984 = vmul.f32 %v1981, 0.003505719
  %v1985 = vadd.f32 %v1983, %v1984
  %v1986 = vmul.f32 %v1935, 0.2852412
  %v1987 = vmul.f32 %v1985, 0.7147588
  %v1988 = vadd.f32 %v1986, %v1987
  %v1989 = vmul.f32 %v1988, 1.999996
  %1990 = vmatpush.msra.mxu0 %v1489
  %1991 = vmatpush.msra.mxu0 %v1488
  %1992 = vmatpush.msra.mxu0 %v1487
  %1993 = vmatpush.msra.mxu0 %v1486
  %1994 = vmatpush.msra.mxu0 %v1485
  %1995 = vmatpush.msra.mxu0 %v1484
  %1996 = vmatpush.msra.mxu0 %v1483
  %1997 = vmatpush.msra.mxu0 %v1482
  %1998 = vmatpush.msra.mxu0 %v1481
  %1999 = vmatpush.msra.mxu0 %v1480
  %2000 = vmatpush.msra.mxu0 %v1479
  %2001 = vmatpush.msra.mxu0 %v1478
  %2002 = vmatpush.msra.mxu0 %v1477
  %2003 = vmatpush.msra.mxu0 %v1476
  %2004 = vmatpush.msra.mxu0 %v1475
  %2005 = vmatpush.msra.mxu0 %v1474
  %2006 = vmatmul.f32.gmra.mxu0 %v1989
  %v2007 = vpop.f32.mrf.mxu0
  %v2008 = vadd.f32 %v1473, %v2007
  %2009 = vdwg.mxu0
  %v2010 = vmul.f32 %v1490, -1.7269388
  %v2012 = vperm.slane %v2010, 0
  %v2014 = vadd.f32 %v2008, %v2012
  %v2015 = vmax.f32 %v2014, 0.0
  %2016 = vmatpush.msra.mxu0 %v1506
  %2017 = vmatpush.msra.mxu0 %v1505
  %2018 = vmatpush.msra.mxu0 %v1504
  %2019 = vmatpush.msra.mxu0 %v1503
  %2020 = vmatpush.msra.mxu0 %v1502
  %2021 = vmatpush.msra.mxu0 %v1501
  %2022 = vmatpush.msra.mxu0 %v1500
  %2023 = vmatpush.msra.mxu0 %v1499
  %2024 = vmatpush.msra.mxu0 %v1498
  %2025 = vmatpush.msra.mxu0 %v1497
  %2026 = vmatpush.msra.mxu0 %v1496
  %2027 = vmatpush.msra.mxu0 %v1495
  %2028 = vmatpush.msra.mxu0 %v1494
  %2029 = vmatpush.msra.mxu0 %v1493
  %2030 = vmatpush.msra.mxu0 %v1492
  %2031 = vmatpush.msra.mxu0 %v1491
  %2032 = vmatmul.f32.gmra.mxu0 %v2015
  %v2033 = vpop.f32.mrf.mxu0
  %v2034 = vadd.f32 %v1537, %v2033
  %2035 = vdwg.mxu0
  %v2036 = vmul.f32 %v1988, 0.999996
  %v2037 = vmul.f32 %v2034, 0.000999998
  %v2038 = vadd.f32 %v2036, %v2037
  %v2039 = vmul.f32 %v1988, 0.0
  %v2040 = vadd.f32 %v2039, %v2038
  %2041 = vst [vmem:[%s14] sm:$0x3] %v2040
  // Predicated region
  $region58: #{beso_forward.1} parent=0 // pred_check
    _
  $region59: #{beso_forward.1} parent=0 // pred_check_branch
    %2043 = sbr.rel (0) target = $region61
  $region60: #{beso_forward.1} parent=0 // pred_region
    _
  $region61: #{beso_forward.1} parent=0 // pred_fallthru
    _
  // Predicated region
  $region62: #{beso_forward.1} parent=0 // pred_check
    _
  $region63: #{beso_forward.1} parent=0 // pred_check_branch
    %2045 = sbr.rel (0) target = $region65
  $region64: #{beso_forward.1} parent=0 // pred_region
    _
  $region65: #{beso_forward.1} parent=0 // pred_fallthru
    _

</llo_original>
